<compile_context>
chip_gen: v7x
topology: tpu7x:2x2x1
jax: 0.10.0
libtpu: 0.0.40
codegen_flags: <defaults>
</compile_context>

<pallas_src>
import math
from functools import partial

import jax
import jax.numpy as jnp
from jax.experimental import pallas as pl
from jax.experimental.pallas import tpu as pltpu


def ae_kernel(x_ref,
              w1, b1, w2, b2, w3, b3, w4, b4,
              w5, b5, w6, b6, w7, b7, w8, b8,
              o_ref):
    x = x_ref[...]                              # f32 (TB, d)

    def lin(h, w_ref, b_ref):
        # bf16 MXU operands, f32 accumulation, f32 bias broadcast.
        return jnp.dot(h.astype(jnp.bfloat16), w_ref[...],
                       preferred_element_type=jnp.float32) + b_ref[...]

    # encoder: Linear->ReLU x3, then Linear (no activation)
    h = jnp.maximum(lin(x, w1, b1), 0.0)
    h = jnp.maximum(lin(h, w2, b2), 0.0)
    h = jnp.maximum(lin(h, w3, b3), 0.0)
    z = lin(h, w4, b4)                          # latent (TB, 3)

    # decoder: Linear->ReLU x3, then Linear->Sigmoid
    h = jnp.maximum(lin(z, w5, b5), 0.0)
    h = jnp.maximum(lin(h, w6, b6), 0.0)
    h = jnp.maximum(lin(h, w7, b7), 0.0)
    y = lin(h, w8, b8)
    # sigmoid: exp on EUP, divide via approx EUP reciprocal (frees VALU slots)
    o_ref[...] = pl.reciprocal(1.0 + jnp.exp(-y), approx=True).astype(o_ref.dtype)


def _round_up(x, m):
    return ((x + m - 1) // m) * m


def init_linear(key, fan_in, fan_out, dtype=jnp.float32):
    """Deterministic init mimicking torch.nn.Linear default (uniform bounds)."""
    kw, kb = jax.random.split(key)
    bound = 1.0 / math.sqrt(fan_in)
    # stored as (in, out) so the kernel does x @ W  (== PyTorch x @ W.T + b)
    w = jax.random.uniform(kw, (fan_in, fan_out), dtype, minval=-bound, maxval=bound)
    b = jax.random.uniform(kb, (1, fan_out), dtype, minval=-bound, maxval=bound)
    return w, b


def make_ae_params(in_shape, key):
    c, h, w = in_shape
    d = c * h * w
    dims = [(d, 128), (128, 64), (64, 12), (12, 3),     # encoder
            (3, 12), (12, 64), (64, 128), (128, d)]     # decoder
    keys = jax.random.split(key, len(dims))
    params = []
    for k, (fi, fo) in zip(keys, dims):
        params.extend(init_linear(k, fi, fo))
    return params  # [w1, b1, ..., w8, b8]  (f32, used directly by the reference)


@partial(jax.jit, static_argnames=("in_shape",))
def ae_forward(x, params, in_shape):
    c, h, w = in_shape
    bs = x.shape[0]
    d = c * h * w
    x2d = x.reshape(bs, d).astype(jnp.float32)

    # Batch tile: up to 256 rows per grid step, at least the 8-row sublane unit.
    TB = min(256, _round_up(bs, 8))
    bs_pad = _round_up(bs, TB)
    if bs_pad != bs:
        x2d = jnp.pad(x2d, ((0, bs_pad - bs), (0, 0)))

    # Weights in bf16 (MXU operands, halved VMEM/HBM traffic); biases in f32.
    kernel_args = [p.astype(jnp.bfloat16) if i % 2 == 0 else p.astype(jnp.float32)
                   for i, p in enumerate(params)]

    # Parameters: full-array blocks, constant block index -> resident in VMEM.
    param_specs = [pl.BlockSpec(p.shape, lambda i: (0, 0)) for p in kernel_args]
    in_specs = [pl.BlockSpec((TB, d), lambda i: (i, 0))] + param_specs
    out_spec = pl.BlockSpec((TB, d), lambda i: (i, 0))

    out2d = pl.pallas_call(
        ae_kernel,
        out_shape=jax.ShapeDtypeStruct((bs_pad, d), jnp.float32),
        grid=(bs_pad // TB,),
        in_specs=in_specs,
        out_specs=out_spec,
        compiler_params=pltpu.CompilerParams(
            dimension_semantics=("parallel",),
            vmem_limit_bytes=16 << 20),
    )(x2d, *kernel_args)

    return out2d[:bs].reshape(bs, c, h, w)


def ae_reference(x, params, in_shape):
    """Pure-JAX f32 reference mirroring the PyTorch forward."""
    c, h, w = in_shape
    bs = x.shape[0]
    a = x.reshape(bs, -1).astype(jnp.float32)
    ws = params[0::2]
    bs_ = params[1::2]
    for i in range(3):
        a = jax.nn.relu(a @ ws[i] + bs_[i])
    a = a @ ws[3] + bs_[3]
    for i in range(4, 7):
        a = jax.nn.relu(a @ ws[i] + bs_[i])
    a = jax.nn.sigmoid(a @ ws[7] + bs_[7])
    return a.reshape(bs, c, h, w)


if __name__ == "__main__":
    in_shape = (4, 16, 16)   # (c, h, w) -> flattened dim = 1024
    batch = 2

    key = jax.random.PRNGKey(0)
    kx, kp = jax.random.split(key)
    x = jax.random.normal(kx, (batch,) + in_shape, dtype=jnp.float32)
    params = make_ae_params(in_shape, kp)

    out = ae_forward(x, params, in_shape)
    out = jax.block_until_ready(out)

    ref = ae_reference(x, params, in_shape)
    assert out.shape == (batch,) + in_shape
    # bf16 matmul operands + approx reciprocal -> compare to f32 reference loosely.
    assert jnp.allclose(out, ref, atol=3e-2, rtol=3e-2), "mismatch vs reference"
    assert jnp.all(out >= 0.0) and jnp.all(out <= 1.0), "sigmoid range violated"

    print("KERNEL_OK")
</pallas_src>

<mosaic_0001>
module attributes {stable_mosaic.version = 11 : i64} {
  func.func @ae_kernel(%arg0: i32, %arg1: memref<8x1024xf32, #tpu.memory_space<vmem>>, %arg2: memref<1024x128xbf16, #tpu.memory_space<vmem>>, %arg3: memref<1x128xf32, #tpu.memory_space<vmem>>, %arg4: memref<128x64xbf16, #tpu.memory_space<vmem>>, %arg5: memref<1x64xf32, #tpu.memory_space<vmem>>, %arg6: memref<64x12xbf16, #tpu.memory_space<vmem>>, %arg7: memref<1x12xf32, #tpu.memory_space<vmem>>, %arg8: memref<12x3xbf16, #tpu.memory_space<vmem>>, %arg9: memref<1x3xf32, #tpu.memory_space<vmem>>, %arg10: memref<3x12xbf16, #tpu.memory_space<vmem>>, %arg11: memref<1x12xf32, #tpu.memory_space<vmem>>, %arg12: memref<12x64xbf16, #tpu.memory_space<vmem>>, %arg13: memref<1x64xf32, #tpu.memory_space<vmem>>, %arg14: memref<64x128xbf16, #tpu.memory_space<vmem>>, %arg15: memref<1x128xf32, #tpu.memory_space<vmem>>, %arg16: memref<128x1024xbf16, #tpu.memory_space<vmem>>, %arg17: memref<1x1024xf32, #tpu.memory_space<vmem>>, %arg18: memref<8x1024xf32, #tpu.memory_space<vmem>>) attributes {dimension_semantics = [#tpu.dimension_semantics<parallel>], iteration_bounds = array<i64: 1>, scalar_prefetch = 0 : i64, scratch_operands = 0 : i64, tpu.core_type = #tpu.core_type<tc>, window_params = [{transform_indices = @transform_0, window_bounds = array<i64: 8, 1024>}, {pipeline_mode = #tpu.pipeline_mode<synchronous>, transform_indices = @transform_1, window_bounds = array<i64: 1024, 128>}, {pipeline_mode = #tpu.pipeline_mode<synchronous>, transform_indices = @transform_2, window_bounds = array<i64: 1, 128>}, {pipeline_mode = #tpu.pipeline_mode<synchronous>, transform_indices = @transform_3, window_bounds = array<i64: 128, 64>}, {pipeline_mode = #tpu.pipeline_mode<synchronous>, transform_indices = @transform_4, window_bounds = array<i64: 1, 64>}, {pipeline_mode = #tpu.pipeline_mode<synchronous>, transform_indices = @transform_5, window_bounds = array<i64: 64, 12>}, {pipeline_mode = #tpu.pipeline_mode<synchronous>, transform_indices = @transform_6, window_bounds = array<i64: 1, 12>}, {pipeline_mode = #tpu.pipeline_mode<synchronous>, transform_indices = @transform_7, window_bounds = array<i64: 12, 3>}, {pipeline_mode = #tpu.pipeline_mode<synchronous>, transform_indices = @transform_8, window_bounds = array<i64: 1, 3>}, {pipeline_mode = #tpu.pipeline_mode<synchronous>, transform_indices = @transform_9, window_bounds = array<i64: 3, 12>}, {pipeline_mode = #tpu.pipeline_mode<synchronous>, transform_indices = @transform_10, window_bounds = array<i64: 1, 12>}, {pipeline_mode = #tpu.pipeline_mode<synchronous>, transform_indices = @transform_11, window_bounds = array<i64: 12, 64>}, {pipeline_mode = #tpu.pipeline_mode<synchronous>, transform_indices = @transform_12, window_bounds = array<i64: 1, 64>}, {pipeline_mode = #tpu.pipeline_mode<synchronous>, transform_indices = @transform_13, window_bounds = array<i64: 64, 128>}, {pipeline_mode = #tpu.pipeline_mode<synchronous>, transform_indices = @transform_14, window_bounds = array<i64: 1, 128>}, {pipeline_mode = #tpu.pipeline_mode<synchronous>, transform_indices = @transform_15, window_bounds = array<i64: 128, 1024>}, {pipeline_mode = #tpu.pipeline_mode<synchronous>, transform_indices = @transform_16, window_bounds = array<i64: 1, 1024>}, {transform_indices = @transform_17, window_bounds = array<i64: 8, 1024>}]} {
    %c0 = arith.constant 0 : index
    %c0_0 = arith.constant 0 : index
    %0 = vector.load %arg1[%c0, %c0_0] : memref<8x1024xf32, #tpu.memory_space<vmem>>, vector<8x1024xf32>
    %1 = arith.truncf %0 : vector<8x1024xf32> to vector<8x1024xbf16>
    %c0_1 = arith.constant 0 : index
    %c0_2 = arith.constant 0 : index
    %2 = vector.load %arg2[%c0_1, %c0_2] : memref<1024x128xbf16, #tpu.memory_space<vmem>>, vector<1024x128xbf16>
    %cst = arith.constant dense<0.000000e+00> : vector<8x128xf32>
    %3 = tpu.matmul %1, %2, %cst {dimension_numbers = #tpu.dot_dimension_numbers<[1], [0], [0], [1], [0, 0, 1, 1], [], []>} : vector<8x1024xbf16>, vector<1024x128xbf16>, vector<8x128xf32> -> vector<8x128xf32>
    %c0_3 = arith.constant 0 : index
    %c0_4 = arith.constant 0 : index
    %4 = vector.load %arg3[%c0_3, %c0_4] : memref<1x128xf32, #tpu.memory_space<vmem>>, vector<1x128xf32>
    %5 = vector.broadcast %4 : vector<1x128xf32> to vector<8x128xf32>
    %6 = arith.addf %3, %5 : vector<8x128xf32>
    %cst_5 = arith.constant 0.000000e+00 : f32
    %7 = vector.broadcast %cst_5 : f32 to vector<8x128xf32>
    %8 = arith.maximumf %6, %7 : vector<8x128xf32>
    %9 = arith.truncf %8 : vector<8x128xf32> to vector<8x128xbf16>
    %c0_6 = arith.constant 0 : index
    %c0_7 = arith.constant 0 : index
    %10 = vector.load %arg4[%c0_6, %c0_7] : memref<128x64xbf16, #tpu.memory_space<vmem>>, vector<128x64xbf16>
    %cst_8 = arith.constant dense<0.000000e+00> : vector<8x64xf32>
    %11 = tpu.matmul %9, %10, %cst_8 {dimension_numbers = #tpu.dot_dimension_numbers<[1], [0], [0], [1], [0, 0, 1, 1], [], []>} : vector<8x128xbf16>, vector<128x64xbf16>, vector<8x64xf32> -> vector<8x64xf32>
    %c0_9 = arith.constant 0 : index
    %c0_10 = arith.constant 0 : index
    %12 = vector.load %arg5[%c0_9, %c0_10] : memref<1x64xf32, #tpu.memory_space<vmem>>, vector<1x64xf32>
    %13 = vector.broadcast %12 : vector<1x64xf32> to vector<8x64xf32>
    %14 = arith.addf %11, %13 : vector<8x64xf32>
    %cst_11 = arith.constant 0.000000e+00 : f32
    %15 = vector.broadcast %cst_11 : f32 to vector<8x64xf32>
    %16 = arith.maximumf %14, %15 : vector<8x64xf32>
    %17 = arith.truncf %16 : vector<8x64xf32> to vector<8x64xbf16>
    %c0_12 = arith.constant 0 : index
    %c0_13 = arith.constant 0 : index
    %18 = vector.load %arg6[%c0_12, %c0_13] : memref<64x12xbf16, #tpu.memory_space<vmem>>, vector<64x12xbf16>
    %cst_14 = arith.constant dense<0.000000e+00> : vector<8x12xf32>
    %19 = tpu.matmul %17, %18, %cst_14 {dimension_numbers = #tpu.dot_dimension_numbers<[1], [0], [0], [1], [0, 0, 1, 1], [], []>} : vector<8x64xbf16>, vector<64x12xbf16>, vector<8x12xf32> -> vector<8x12xf32>
    %c0_15 = arith.constant 0 : index
    %c0_16 = arith.constant 0 : index
    %20 = vector.load %arg7[%c0_15, %c0_16] : memref<1x12xf32, #tpu.memory_space<vmem>>, vector<1x12xf32>
    %21 = vector.broadcast %20 : vector<1x12xf32> to vector<8x12xf32>
    %22 = arith.addf %19, %21 : vector<8x12xf32>
    %cst_17 = arith.constant 0.000000e+00 : f32
    %23 = vector.broadcast %cst_17 : f32 to vector<8x12xf32>
    %24 = arith.maximumf %22, %23 : vector<8x12xf32>
    %25 = arith.truncf %24 : vector<8x12xf32> to vector<8x12xbf16>
    %c0_18 = arith.constant 0 : index
    %c0_19 = arith.constant 0 : index
    %26 = vector.load %arg8[%c0_18, %c0_19] : memref<12x3xbf16, #tpu.memory_space<vmem>>, vector<12x3xbf16>
    %cst_20 = arith.constant dense<0.000000e+00> : vector<8x3xf32>
    %27 = tpu.matmul %25, %26, %cst_20 {dimension_numbers = #tpu.dot_dimension_numbers<[1], [0], [0], [1], [0, 0, 1, 1], [], []>} : vector<8x12xbf16>, vector<12x3xbf16>, vector<8x3xf32> -> vector<8x3xf32>
    %c0_21 = arith.constant 0 : index
    %c0_22 = arith.constant 0 : index
    %28 = vector.load %arg9[%c0_21, %c0_22] : memref<1x3xf32, #tpu.memory_space<vmem>>, vector<1x3xf32>
    %29 = vector.broadcast %28 : vector<1x3xf32> to vector<8x3xf32>
    %30 = arith.addf %27, %29 : vector<8x3xf32>
    %31 = arith.truncf %30 : vector<8x3xf32> to vector<8x3xbf16>
    %c0_23 = arith.constant 0 : index
    %c0_24 = arith.constant 0 : index
    %32 = vector.load %arg10[%c0_23, %c0_24] : memref<3x12xbf16, #tpu.memory_space<vmem>>, vector<3x12xbf16>
    %cst_25 = arith.constant dense<0.000000e+00> : vector<8x12xf32>
    %33 = tpu.matmul %31, %32, %cst_25 {dimension_numbers = #tpu.dot_dimension_numbers<[1], [0], [0], [1], [0, 0, 1, 1], [], []>} : vector<8x3xbf16>, vector<3x12xbf16>, vector<8x12xf32> -> vector<8x12xf32>
    %c0_26 = arith.constant 0 : index
    %c0_27 = arith.constant 0 : index
    %34 = vector.load %arg11[%c0_26, %c0_27] : memref<1x12xf32, #tpu.memory_space<vmem>>, vector<1x12xf32>
    %35 = vector.broadcast %34 : vector<1x12xf32> to vector<8x12xf32>
    %36 = arith.addf %33, %35 : vector<8x12xf32>
    %cst_28 = arith.constant 0.000000e+00 : f32
    %37 = vector.broadcast %cst_28 : f32 to vector<8x12xf32>
    %38 = arith.maximumf %36, %37 : vector<8x12xf32>
    %39 = arith.truncf %38 : vector<8x12xf32> to vector<8x12xbf16>
    %c0_29 = arith.constant 0 : index
    %c0_30 = arith.constant 0 : index
    %40 = vector.load %arg12[%c0_29, %c0_30] : memref<12x64xbf16, #tpu.memory_space<vmem>>, vector<12x64xbf16>
    %cst_31 = arith.constant dense<0.000000e+00> : vector<8x64xf32>
    %41 = tpu.matmul %39, %40, %cst_31 {dimension_numbers = #tpu.dot_dimension_numbers<[1], [0], [0], [1], [0, 0, 1, 1], [], []>} : vector<8x12xbf16>, vector<12x64xbf16>, vector<8x64xf32> -> vector<8x64xf32>
    %c0_32 = arith.constant 0 : index
    %c0_33 = arith.constant 0 : index
    %42 = vector.load %arg13[%c0_32, %c0_33] : memref<1x64xf32, #tpu.memory_space<vmem>>, vector<1x64xf32>
    %43 = vector.broadcast %42 : vector<1x64xf32> to vector<8x64xf32>
    %44 = arith.addf %41, %43 : vector<8x64xf32>
    %cst_34 = arith.constant 0.000000e+00 : f32
    %45 = vector.broadcast %cst_34 : f32 to vector<8x64xf32>
    %46 = arith.maximumf %44, %45 : vector<8x64xf32>
    %47 = arith.truncf %46 : vector<8x64xf32> to vector<8x64xbf16>
    %c0_35 = arith.constant 0 : index
    %c0_36 = arith.constant 0 : index
    %48 = vector.load %arg14[%c0_35, %c0_36] : memref<64x128xbf16, #tpu.memory_space<vmem>>, vector<64x128xbf16>
    %cst_37 = arith.constant dense<0.000000e+00> : vector<8x128xf32>
    %49 = tpu.matmul %47, %48, %cst_37 {dimension_numbers = #tpu.dot_dimension_numbers<[1], [0], [0], [1], [0, 0, 1, 1], [], []>} : vector<8x64xbf16>, vector<64x128xbf16>, vector<8x128xf32> -> vector<8x128xf32>
    %c0_38 = arith.constant 0 : index
    %c0_39 = arith.constant 0 : index
    %50 = vector.load %arg15[%c0_38, %c0_39] : memref<1x128xf32, #tpu.memory_space<vmem>>, vector<1x128xf32>
    %51 = vector.broadcast %50 : vector<1x128xf32> to vector<8x128xf32>
    %52 = arith.addf %49, %51 : vector<8x128xf32>
    %cst_40 = arith.constant 0.000000e+00 : f32
    %53 = vector.broadcast %cst_40 : f32 to vector<8x128xf32>
    %54 = arith.maximumf %52, %53 : vector<8x128xf32>
    %55 = arith.truncf %54 : vector<8x128xf32> to vector<8x128xbf16>
    %c0_41 = arith.constant 0 : index
    %c0_42 = arith.constant 0 : index
    %56 = vector.load %arg16[%c0_41, %c0_42] : memref<128x1024xbf16, #tpu.memory_space<vmem>>, vector<128x1024xbf16>
    %cst_43 = arith.constant dense<0.000000e+00> : vector<8x1024xf32>
    %57 = tpu.matmul %55, %56, %cst_43 {dimension_numbers = #tpu.dot_dimension_numbers<[1], [0], [0], [1], [0, 0, 1, 1], [], []>} : vector<8x128xbf16>, vector<128x1024xbf16>, vector<8x1024xf32> -> vector<8x1024xf32>
    %c0_44 = arith.constant 0 : index
    %c0_45 = arith.constant 0 : index
    %58 = vector.load %arg17[%c0_44, %c0_45] : memref<1x1024xf32, #tpu.memory_space<vmem>>, vector<1x1024xf32>
    %59 = vector.broadcast %58 : vector<1x1024xf32> to vector<8x1024xf32>
    %60 = arith.addf %57, %59 : vector<8x1024xf32>
    %cst_46 = arith.constant 0.000000e+00 : f32
    %61 = vector.broadcast %cst_46 : f32 to vector<8x1024xf32>
    %62 = arith.subf %61, %60 : vector<8x1024xf32>
    %63 = math.exp %62 : vector<8x1024xf32>
    %cst_47 = arith.constant 1.000000e+00 : f32
    %64 = vector.broadcast %cst_47 : f32 to vector<8x1024xf32>
    %65 = arith.addf %64, %63 : vector<8x1024xf32>
    %66 = tpu.reciprocal %65 {approx = true} : vector<8x1024xf32> -> vector<8x1024xf32>
    %c0_48 = arith.constant 0 : index
    %c0_49 = arith.constant 0 : index
    %67 = vector.load %arg18[%c0_48, %c0_49] : memref<8x1024xf32, #tpu.memory_space<vmem>>, vector<8x1024xf32>
    tpu.vector_store %arg18[%c0_48, %c0_49], %66 {strides = array<i32>} : memref<8x1024xf32, #tpu.memory_space<vmem>>, vector<8x1024xf32>,
    return
  }
  func.func @transform_0(%arg0: i32) -> (i32, i32) {
    %c0_i32 = arith.constant 0 : i32
    %c0_i32_0 = arith.constant 0 : i32
    return %arg0, %c0_i32 : i32, i32
  }
  func.func @transform_1(%arg0: i32) -> (i32, i32) {
    %c0_i32 = arith.constant 0 : i32
    %c0_i32_0 = arith.constant 0 : i32
    %c0_i32_1 = arith.constant 0 : i32
    return %c0_i32, %c0_i32_0 : i32, i32
  }
  func.func @transform_2(%arg0: i32) -> (i32, i32) {
    %c0_i32 = arith.constant 0 : i32
    %c0_i32_0 = arith.constant 0 : i32
    %c0_i32_1 = arith.constant 0 : i32
    return %c0_i32, %c0_i32_0 : i32, i32
  }
  func.func @transform_3(%arg0: i32) -> (i32, i32) {
    %c0_i32 = arith.constant 0 : i32
    %c0_i32_0 = arith.constant 0 : i32
    %c0_i32_1 = arith.constant 0 : i32
    return %c0_i32, %c0_i32_0 : i32, i32
  }
  func.func @transform_4(%arg0: i32) -> (i32, i32) {
    %c0_i32 = arith.constant 0 : i32
    %c0_i32_0 = arith.constant 0 : i32
    %c0_i32_1 = arith.constant 0 : i32
    return %c0_i32, %c0_i32_0 : i32, i32
  }
  func.func @transform_5(%arg0: i32) -> (i32, i32) {
    %c0_i32 = arith.constant 0 : i32
    %c0_i32_0 = arith.constant 0 : i32
    %c0_i32_1 = arith.constant 0 : i32
    return %c0_i32, %c0_i32_0 : i32, i32
  }
  func.func @transform_6(%arg0: i32) -> (i32, i32) {
    %c0_i32 = arith.constant 0 : i32
    %c0_i32_0 = arith.constant 0 : i32
    %c0_i32_1 = arith.constant 0 : i32
    return %c0_i32, %c0_i32_0 : i32, i32
  }
  func.func @transform_7(%arg0: i32) -> (i32, i32) {
    %c0_i32 = arith.constant 0 : i32
    %c0_i32_0 = arith.constant 0 : i32
    %c0_i32_1 = arith.constant 0 : i32
    return %c0_i32, %c0_i32_0 : i32, i32
  }
  func.func @transform_8(%arg0: i32) -> (i32, i32) {
    %c0_i32 = arith.constant 0 : i32
    %c0_i32_0 = arith.constant 0 : i32
    %c0_i32_1 = arith.constant 0 : i32
    return %c0_i32, %c0_i32_0 : i32, i32
  }
  func.func @transform_9(%arg0: i32) -> (i32, i32) {
    %c0_i32 = arith.constant 0 : i32
    %c0_i32_0 = arith.constant 0 : i32
    %c0_i32_1 = arith.constant 0 : i32
    return %c0_i32, %c0_i32_0 : i32, i32
  }
  func.func @transform_10(%arg0: i32) -> (i32, i32) {
    %c0_i32 = arith.constant 0 : i32
    %c0_i32_0 = arith.constant 0 : i32
    %c0_i32_1 = arith.constant 0 : i32
    return %c0_i32, %c0_i32_0 : i32, i32
  }
  func.func @transform_11(%arg0: i32) -> (i32, i32) {
    %c0_i32 = arith.constant 0 : i32
    %c0_i32_0 = arith.constant 0 : i32
    %c0_i32_1 = arith.constant 0 : i32
    return %c0_i32, %c0_i32_0 : i32, i32
  }
  func.func @transform_12(%arg0: i32) -> (i32, i32) {
    %c0_i32 = arith.constant 0 : i32
    %c0_i32_0 = arith.constant 0 : i32
    %c0_i32_1 = arith.constant 0 : i32
    return %c0_i32, %c0_i32_0 : i32, i32
  }
  func.func @transform_13(%arg0: i32) -> (i32, i32) {
    %c0_i32 = arith.constant 0 : i32
    %c0_i32_0 = arith.constant 0 : i32
    %c0_i32_1 = arith.constant 0 : i32
    return %c0_i32, %c0_i32_0 : i32, i32
  }
  func.func @transform_14(%arg0: i32) -> (i32, i32) {
    %c0_i32 = arith.constant 0 : i32
    %c0_i32_0 = arith.constant 0 : i32
    %c0_i32_1 = arith.constant 0 : i32
    return %c0_i32, %c0_i32_0 : i32, i32
  }
  func.func @transform_15(%arg0: i32) -> (i32, i32) {
    %c0_i32 = arith.constant 0 : i32
    %c0_i32_0 = arith.constant 0 : i32
    %c0_i32_1 = arith.constant 0 : i32
    return %c0_i32, %c0_i32_0 : i32, i32
  }
  func.func @transform_16(%arg0: i32) -> (i32, i32) {
    %c0_i32 = arith.constant 0 : i32
    %c0_i32_0 = arith.constant 0 : i32
    %c0_i32_1 = arith.constant 0 : i32
    return %c0_i32, %c0_i32_0 : i32, i32
  }
  func.func @transform_17(%arg0: i32) -> (i32, i32) {
    %c0_i32 = arith.constant 0 : i32
    %c0_i32_0 = arith.constant 0 : i32
    return %arg0, %c0_i32 : i32, i32
  }
}

</mosaic_0001>

<llo_original>
// kernel: ae_forward.1
$region0: #{ae_forward.1}
  #allocation0 [shape = 'u32[]', space=smem, size = 0x4, offset = 0x4, fixed_abs, tag = 'smem constant byte address 0x4 - core index']
  #allocation1 [shape = 'u32[144,128]{1,0:T(1,128)}', space=vmem, size = 0x12000, scoped, tag = 'internal scratch']
  %s0 = inlined_call_operand.vmem [shape: f32[8,1024], index: 0, kind: input, shape index: {}]
  %s1 = inlined_call_operand.vmem [shape: bf16[1024,128], index: 1, kind: input, shape index: {}]
  %s2 = inlined_call_operand.vmem [shape: f32[1,128], index: 2, kind: input, shape index: {}]
  %s3 = inlined_call_operand.vmem [shape: bf16[128,64], index: 3, kind: input, shape index: {}]
  %s4 = inlined_call_operand.vmem [shape: f32[1,64], index: 4, kind: input, shape index: {}]
  %s5 = inlined_call_operand.vmem [shape: bf16[64,12], index: 5, kind: input, shape index: {}]
  %s6 = inlined_call_operand.vmem [shape: f32[1,12], index: 6, kind: input, shape index: {}]
  %s7 = inlined_call_operand.vmem [shape: bf16[12,3], index: 7, kind: input, shape index: {}]
  %s8 = inlined_call_operand.vmem [shape: f32[1,3], index: 8, kind: input, shape index: {}]
  %s9 = inlined_call_operand.vmem [shape: bf16[3,12], index: 9, kind: input, shape index: {}]
  %s10 = inlined_call_operand.vmem [shape: f32[1,12], index: 10, kind: input, shape index: {}]
  %s11 = inlined_call_operand.vmem [shape: bf16[12,64], index: 11, kind: input, shape index: {}]
  %s12 = inlined_call_operand.vmem [shape: f32[1,64], index: 12, kind: input, shape index: {}]
  %s13 = inlined_call_operand.vmem [shape: bf16[64,128], index: 13, kind: input, shape index: {}]
  %s14 = inlined_call_operand.vmem [shape: f32[1,128], index: 14, kind: input, shape index: {}]
  %s15 = inlined_call_operand.vmem [shape: bf16[128,1024], index: 15, kind: input, shape index: {}]
  %s16 = inlined_call_operand.vmem [shape: f32[1,1024], index: 16, kind: input, shape index: {}]
  %s17 = inlined_call_operand.vmem [shape: f32[8,1024], index: 17, kind: output, shape index: {}]
  %s18 = sld [smem:[#allocation0]]
  $region78: #{ae_forward.1} parent=0
    _
  %s20 = ssub.s32 1, %s18
  %s21 = scalar_select 0, %s20, %s18
  // Predicated region
  $region2: #{ae_forward.1} parent=0 // pred_check
    _
  $region3: #{ae_forward.1} parent=0 // pred_check_branch
    %23 = sbr.rel (0) target = $region5
  $region4: #{ae_forward.1} parent=0 // pred_region
    _
  $region5: #{ae_forward.1} parent=0 // pred_fallthru
    _
  // Predicated region
  $region6: #{ae_forward.1} parent=0 // pred_check
    _
  $region7: #{ae_forward.1} parent=0 // pred_check_branch
    %25 = sbr.rel (0) target = $region9
  $region8: #{ae_forward.1} parent=0 // pred_region
    _
  $region9: #{ae_forward.1} parent=0 // pred_fallthru
    _
  // Predicated region
  $region10: #{ae_forward.1} parent=0 // pred_check
    _
  $region11: #{ae_forward.1} parent=0 // pred_check_branch
    %27 = sbr.rel (0) target = $region13
  $region12: #{ae_forward.1} parent=0 // pred_region
    _
  $region13: #{ae_forward.1} parent=0 // pred_fallthru
    _
  // Predicated region
  $region14: #{ae_forward.1} parent=0 // pred_check
    _
  $region15: #{ae_forward.1} parent=0 // pred_check_branch
    %29 = sbr.rel (0) target = $region17
  $region16: #{ae_forward.1} parent=0 // pred_region
    _
  $region17: #{ae_forward.1} parent=0 // pred_fallthru
    _
  // Predicated region
  $region18: #{ae_forward.1} parent=0 // pred_check
    _
  $region19: #{ae_forward.1} parent=0 // pred_check_branch
    %31 = sbr.rel (0) target = $region21
  $region20: #{ae_forward.1} parent=0 // pred_region
    _
  $region21: #{ae_forward.1} parent=0 // pred_fallthru
    _
  // Predicated region
  $region22: #{ae_forward.1} parent=0 // pred_check
    _
  $region23: #{ae_forward.1} parent=0 // pred_check_branch
    %33 = sbr.rel (0) target = $region25
  $region24: #{ae_forward.1} parent=0 // pred_region
    _
  $region25: #{ae_forward.1} parent=0 // pred_fallthru
    _
  // Predicated region
  $region26: #{ae_forward.1} parent=0 // pred_check
    _
  $region27: #{ae_forward.1} parent=0 // pred_check_branch
    %35 = sbr.rel (0) target = $region29
  $region28: #{ae_forward.1} parent=0 // pred_region
    _
  $region29: #{ae_forward.1} parent=0 // pred_fallthru
    _
  // Predicated region
  $region30: #{ae_forward.1} parent=0 // pred_check
    _
  $region31: #{ae_forward.1} parent=0 // pred_check_branch
    %37 = sbr.rel (0) target = $region33
  $region32: #{ae_forward.1} parent=0 // pred_region
    _
  $region33: #{ae_forward.1} parent=0 // pred_fallthru
    _
  // Predicated region
  $region34: #{ae_forward.1} parent=0 // pred_check
    _
  $region35: #{ae_forward.1} parent=0 // pred_check_branch
    %39 = sbr.rel (0) target = $region37
  $region36: #{ae_forward.1} parent=0 // pred_region
    _
  $region37: #{ae_forward.1} parent=0 // pred_fallthru
    _
  // Predicated region
  $region38: #{ae_forward.1} parent=0 // pred_check
    _
  $region39: #{ae_forward.1} parent=0 // pred_check_branch
    %41 = sbr.rel (0) target = $region41
  $region40: #{ae_forward.1} parent=0 // pred_region
    _
  $region41: #{ae_forward.1} parent=0 // pred_fallthru
    _
  // Predicated region
  $region42: #{ae_forward.1} parent=0 // pred_check
    _
  $region43: #{ae_forward.1} parent=0 // pred_check_branch
    %43 = sbr.rel (0) target = $region45
  $region44: #{ae_forward.1} parent=0 // pred_region
    _
  $region45: #{ae_forward.1} parent=0 // pred_fallthru
    _
  // Predicated region
  $region46: #{ae_forward.1} parent=0 // pred_check
    _
  $region47: #{ae_forward.1} parent=0 // pred_check_branch
    %45 = sbr.rel (0) target = $region49
  $region48: #{ae_forward.1} parent=0 // pred_region
    _
  $region49: #{ae_forward.1} parent=0 // pred_fallthru
    _
  // Predicated region
  $region50: #{ae_forward.1} parent=0 // pred_check
    _
  $region51: #{ae_forward.1} parent=0 // pred_check_branch
    %47 = sbr.rel (0) target = $region53
  $region52: #{ae_forward.1} parent=0 // pred_region
    _
  $region53: #{ae_forward.1} parent=0 // pred_fallthru
    _
  // Predicated region
  $region54: #{ae_forward.1} parent=0 // pred_check
    _
  $region55: #{ae_forward.1} parent=0 // pred_check_branch
    %49 = sbr.rel (0) target = $region57
  $region56: #{ae_forward.1} parent=0 // pred_region
    _
  $region57: #{ae_forward.1} parent=0 // pred_fallthru
    _
  // Predicated region
  $region58: #{ae_forward.1} parent=0 // pred_check
    _
  $region59: #{ae_forward.1} parent=0 // pred_check_branch
    %51 = sbr.rel (0) target = $region61
  $region60: #{ae_forward.1} parent=0 // pred_region
    _
  $region61: #{ae_forward.1} parent=0 // pred_fallthru
    _
  // Predicated region
  $region62: #{ae_forward.1} parent=0 // pred_check
    _
  $region63: #{ae_forward.1} parent=0 // pred_check_branch
    %53 = sbr.rel (0) target = $region65
  $region64: #{ae_forward.1} parent=0 // pred_region
    _
  $region65: #{ae_forward.1} parent=0 // pred_fallthru
    _
  // Predicated region
  $region66: #{ae_forward.1} parent=0 // pred_check
    _
  $region67: #{ae_forward.1} parent=0 // pred_check_branch
    %55 = sbr.rel (0) target = $region69
  $region68: #{ae_forward.1} parent=0 // pred_region
    _
  $region69: #{ae_forward.1} parent=0 // pred_fallthru
    _
  %v57 = vld [vmem:[%s0] sm:$0xff]
  %v58 = vld [vmem:[%s0 + $0x8] sm:$0xff]
  %v59 = vld [vmem:[%s0 + $0x10] sm:$0xff]
  %v60 = vld [vmem:[%s0 + $0x18] sm:$0xff]
  %v61 = vld [vmem:[%s0 + $0x20] sm:$0xff]
  %v62 = vld [vmem:[%s0 + $0x28] sm:$0xff]
  %v63 = vld [vmem:[%s0 + $0x30] sm:$0xff]
  %v64 = vld [vmem:[%s0 + $0x38] sm:$0xff]
  %v65 = vpack.c.bf16 %v57, %v57
  %v66 = vpack.c.bf16 %v58, %v58
  %v67 = vpack.c.bf16 %v59, %v59
  %v68 = vpack.c.bf16 %v60, %v60
  %v69 = vpack.c.bf16 %v61, %v61
  %v70 = vpack.c.bf16 %v62, %v62
  %v71 = vpack.c.bf16 %v63, %v63
  %v72 = vpack.c.bf16 %v64, %v64
  %v73 = vld [vmem:[%s1] sm:$0xf]
  %v74 = vld [vmem:[%s1 + $0x4] sm:$0xf]
  %v75 = vld [vmem:[%s1 + $0x8] sm:$0xf]
  %v76 = vld [vmem:[%s1 + $0xc] sm:$0xf]
  %v77 = vld [vmem:[%s1 + $0x10] sm:$0xf]
  %v78 = vld [vmem:[%s1 + $0x14] sm:$0xf]
  %v79 = vld [vmem:[%s1 + $0x18] sm:$0xf]
  %v80 = vld [vmem:[%s1 + $0x1c] sm:$0xf]
  %v81 = vld [vmem:[%s1 + $0x20] sm:$0xf]
  %v82 = vld [vmem:[%s1 + $0x24] sm:$0xf]
  %v83 = vld [vmem:[%s1 + $0x28] sm:$0xf]
  %v84 = vld [vmem:[%s1 + $0x2c] sm:$0xf]
  %v85 = vld [vmem:[%s1 + $0x30] sm:$0xf]
  %v86 = vld [vmem:[%s1 + $0x34] sm:$0xf]
  %v87 = vld [vmem:[%s1 + $0x38] sm:$0xf]
  %v88 = vld [vmem:[%s1 + $0x3c] sm:$0xf]
  %v89 = vld [vmem:[%s1 + $0x40] sm:$0xf]
  %v90 = vld [vmem:[%s1 + $0x44] sm:$0xf]
  %v91 = vld [vmem:[%s1 + $0x48] sm:$0xf]
  %v92 = vld [vmem:[%s1 + $0x4c] sm:$0xf]
  %v93 = vld [vmem:[%s1 + $0x50] sm:$0xf]
  %v94 = vld [vmem:[%s1 + $0x54] sm:$0xf]
  %v95 = vld [vmem:[%s1 + $0x58] sm:$0xf]
  %v96 = vld [vmem:[%s1 + $0x5c] sm:$0xf]
  %v97 = vld [vmem:[%s1 + $0x60] sm:$0xf]
  %v98 = vld [vmem:[%s1 + $0x64] sm:$0xf]
  %v99 = vld [vmem:[%s1 + $0x68] sm:$0xf]
  %v100 = vld [vmem:[%s1 + $0x6c] sm:$0xf]
  %v101 = vld [vmem:[%s1 + $0x70] sm:$0xf]
  %v102 = vld [vmem:[%s1 + $0x74] sm:$0xf]
  %v103 = vld [vmem:[%s1 + $0x78] sm:$0xf]
  %v104 = vld [vmem:[%s1 + $0x7c] sm:$0xf]
  %v105 = vld [vmem:[%s1 + $0x80] sm:$0xf]
  %v106 = vld [vmem:[%s1 + $0x84] sm:$0xf]
  %v107 = vld [vmem:[%s1 + $0x88] sm:$0xf]
  %v108 = vld [vmem:[%s1 + $0x8c] sm:$0xf]
  %v109 = vld [vmem:[%s1 + $0x90] sm:$0xf]
  %v110 = vld [vmem:[%s1 + $0x94] sm:$0xf]
  %v111 = vld [vmem:[%s1 + $0x98] sm:$0xf]
  %v112 = vld [vmem:[%s1 + $0x9c] sm:$0xf]
  %v113 = vld [vmem:[%s1 + $0xa0] sm:$0xf]
  %v114 = vld [vmem:[%s1 + $0xa4] sm:$0xf]
  %v115 = vld [vmem:[%s1 + $0xa8] sm:$0xf]
  %v116 = vld [vmem:[%s1 + $0xac] sm:$0xf]
  %v117 = vld [vmem:[%s1 + $0xb0] sm:$0xf]
  %v118 = vld [vmem:[%s1 + $0xb4] sm:$0xf]
  %v119 = vld [vmem:[%s1 + $0xb8] sm:$0xf]
  %v120 = vld [vmem:[%s1 + $0xbc] sm:$0xf]
  %v121 = vld [vmem:[%s1 + $0xc0] sm:$0xf]
  %v122 = vld [vmem:[%s1 + $0xc4] sm:$0xf]
  %v123 = vld [vmem:[%s1 + $0xc8] sm:$0xf]
  %v124 = vld [vmem:[%s1 + $0xcc] sm:$0xf]
  %v125 = vld [vmem:[%s1 + $0xd0] sm:$0xf]
  %v126 = vld [vmem:[%s1 + $0xd4] sm:$0xf]
  %v127 = vld [vmem:[%s1 + $0xd8] sm:$0xf]
  %v128 = vld [vmem:[%s1 + $0xdc] sm:$0xf]
  %v129 = vld [vmem:[%s1 + $0xe0] sm:$0xf]
  %v130 = vld [vmem:[%s1 + $0xe4] sm:$0xf]
  %v131 = vld [vmem:[%s1 + $0xe8] sm:$0xf]
  %v132 = vld [vmem:[%s1 + $0xec] sm:$0xf]
  %v133 = vld [vmem:[%s1 + $0xf0] sm:$0xf]
  %v134 = vld [vmem:[%s1 + $0xf4] sm:$0xf]
  %v135 = vld [vmem:[%s1 + $0xf8] sm:$0xf]
  %v136 = vld [vmem:[%s1 + $0xfc] sm:$0xf]
  %v137 = vld [vmem:[%s1 + $0x100] sm:$0xf]
  %v138 = vld [vmem:[%s1 + $0x104] sm:$0xf]
  %v139 = vld [vmem:[%s1 + $0x108] sm:$0xf]
  %v140 = vld [vmem:[%s1 + $0x10c] sm:$0xf]
  %v141 = vld [vmem:[%s1 + $0x110] sm:$0xf]
  %v142 = vld [vmem:[%s1 + $0x114] sm:$0xf]
  %v143 = vld [vmem:[%s1 + $0x118] sm:$0xf]
  %v144 = vld [vmem:[%s1 + $0x11c] sm:$0xf]
  %v145 = vld [vmem:[%s1 + $0x120] sm:$0xf]
  %v146 = vld [vmem:[%s1 + $0x124] sm:$0xf]
  %v147 = vld [vmem:[%s1 + $0x128] sm:$0xf]
  %v148 = vld [vmem:[%s1 + $0x12c] sm:$0xf]
  %v149 = vld [vmem:[%s1 + $0x130] sm:$0xf]
  %v150 = vld [vmem:[%s1 + $0x134] sm:$0xf]
  %v151 = vld [vmem:[%s1 + $0x138] sm:$0xf]
  %v152 = vld [vmem:[%s1 + $0x13c] sm:$0xf]
  %v153 = vld [vmem:[%s1 + $0x140] sm:$0xf]
  %v154 = vld [vmem:[%s1 + $0x144] sm:$0xf]
  %v155 = vld [vmem:[%s1 + $0x148] sm:$0xf]
  %v156 = vld [vmem:[%s1 + $0x14c] sm:$0xf]
  %v157 = vld [vmem:[%s1 + $0x150] sm:$0xf]
  %v158 = vld [vmem:[%s1 + $0x154] sm:$0xf]
  %v159 = vld [vmem:[%s1 + $0x158] sm:$0xf]
  %v160 = vld [vmem:[%s1 + $0x15c] sm:$0xf]
  %v161 = vld [vmem:[%s1 + $0x160] sm:$0xf]
  %v162 = vld [vmem:[%s1 + $0x164] sm:$0xf]
  %v163 = vld [vmem:[%s1 + $0x168] sm:$0xf]
  %v164 = vld [vmem:[%s1 + $0x16c] sm:$0xf]
  %v165 = vld [vmem:[%s1 + $0x170] sm:$0xf]
  %v166 = vld [vmem:[%s1 + $0x174] sm:$0xf]
  %v167 = vld [vmem:[%s1 + $0x178] sm:$0xf]
  %v168 = vld [vmem:[%s1 + $0x17c] sm:$0xf]
  %v169 = vld [vmem:[%s1 + $0x180] sm:$0xf]
  %v170 = vld [vmem:[%s1 + $0x184] sm:$0xf]
  %v171 = vld [vmem:[%s1 + $0x188] sm:$0xf]
  %v172 = vld [vmem:[%s1 + $0x18c] sm:$0xf]
  %v173 = vld [vmem:[%s1 + $0x190] sm:$0xf]
  %v174 = vld [vmem:[%s1 + $0x194] sm:$0xf]
  %v175 = vld [vmem:[%s1 + $0x198] sm:$0xf]
  %v176 = vld [vmem:[%s1 + $0x19c] sm:$0xf]
  %v177 = vld [vmem:[%s1 + $0x1a0] sm:$0xf]
  %v178 = vld [vmem:[%s1 + $0x1a4] sm:$0xf]
  %v179 = vld [vmem:[%s1 + $0x1a8] sm:$0xf]
  %v180 = vld [vmem:[%s1 + $0x1ac] sm:$0xf]
  %v181 = vld [vmem:[%s1 + $0x1b0] sm:$0xf]
  %v182 = vld [vmem:[%s1 + $0x1b4] sm:$0xf]
  %v183 = vld [vmem:[%s1 + $0x1b8] sm:$0xf]
  %v184 = vld [vmem:[%s1 + $0x1bc] sm:$0xf]
  %v185 = vld [vmem:[%s1 + $0x1c0] sm:$0xf]
  %v186 = vld [vmem:[%s1 + $0x1c4] sm:$0xf]
  %v187 = vld [vmem:[%s1 + $0x1c8] sm:$0xf]
  %v188 = vld [vmem:[%s1 + $0x1cc] sm:$0xf]
  %v189 = vld [vmem:[%s1 + $0x1d0] sm:$0xf]
  %v190 = vld [vmem:[%s1 + $0x1d4] sm:$0xf]
  %v191 = vld [vmem:[%s1 + $0x1d8] sm:$0xf]
  %v192 = vld [vmem:[%s1 + $0x1dc] sm:$0xf]
  %v193 = vld [vmem:[%s1 + $0x1e0] sm:$0xf]
  %v194 = vld [vmem:[%s1 + $0x1e4] sm:$0xf]
  %v195 = vld [vmem:[%s1 + $0x1e8] sm:$0xf]
  %v196 = vld [vmem:[%s1 + $0x1ec] sm:$0xf]
  %v197 = vld [vmem:[%s1 + $0x1f0] sm:$0xf]
  %v198 = vld [vmem:[%s1 + $0x1f4] sm:$0xf]
  %v199 = vld [vmem:[%s1 + $0x1f8] sm:$0xf]
  %v200 = vld [vmem:[%s1 + $0x1fc] sm:$0xf]
  %v201 = vld [vmem:[%s2] sm:$0x1]
  %v203 = vlaneseq
  %v204 = vshrl.u32 %v203, 7
  %v205 = vsub.s32 0, %v204
  %v206 = vrot.slane %v201, %v205
  %v336 = vunpack.c.l.b16 %v73
  %v337 = vunpack.c.l.b16 %v74
  %v338 = vunpack.c.l.b16 %v75
  %v339 = vunpack.c.l.b16 %v76
  %v340 = vunpack.c.l.b16 %v77
  %v341 = vunpack.c.l.b16 %v78
  %v342 = vunpack.c.l.b16 %v79
  %v343 = vunpack.c.l.b16 %v80
  %v344 = vunpack.c.l.b16 %v81
  %v345 = vunpack.c.l.b16 %v82
  %v346 = vunpack.c.l.b16 %v83
  %v347 = vunpack.c.l.b16 %v84
  %v348 = vunpack.c.l.b16 %v85
  %v349 = vunpack.c.l.b16 %v86
  %v350 = vunpack.c.l.b16 %v87
  %v351 = vunpack.c.l.b16 %v88
  %v352 = vunpack.c.l.b16 %v89
  %v353 = vunpack.c.l.b16 %v90
  %v354 = vunpack.c.l.b16 %v91
  %v355 = vunpack.c.l.b16 %v92
  %v356 = vunpack.c.l.b16 %v93
  %v357 = vunpack.c.l.b16 %v94
  %v358 = vunpack.c.l.b16 %v95
  %v359 = vunpack.c.l.b16 %v96
  %v360 = vunpack.c.l.b16 %v97
  %v361 = vunpack.c.l.b16 %v98
  %v362 = vunpack.c.l.b16 %v99
  %v363 = vunpack.c.l.b16 %v100
  %v364 = vunpack.c.l.b16 %v101
  %v365 = vunpack.c.l.b16 %v102
  %v366 = vunpack.c.l.b16 %v103
  %v367 = vunpack.c.l.b16 %v104
  %v368 = vunpack.c.l.b16 %v105
  %v369 = vunpack.c.l.b16 %v106
  %v370 = vunpack.c.l.b16 %v107
  %v371 = vunpack.c.l.b16 %v108
  %v372 = vunpack.c.l.b16 %v109
  %v373 = vunpack.c.l.b16 %v110
  %v374 = vunpack.c.l.b16 %v111
  %v375 = vunpack.c.l.b16 %v112
  %v376 = vunpack.c.l.b16 %v113
  %v377 = vunpack.c.l.b16 %v114
  %v378 = vunpack.c.l.b16 %v115
  %v379 = vunpack.c.l.b16 %v116
  %v380 = vunpack.c.l.b16 %v117
  %v381 = vunpack.c.l.b16 %v118
  %v382 = vunpack.c.l.b16 %v119
  %v383 = vunpack.c.l.b16 %v120
  %v384 = vunpack.c.l.b16 %v121
  %v385 = vunpack.c.l.b16 %v122
  %v386 = vunpack.c.l.b16 %v123
  %v387 = vunpack.c.l.b16 %v124
  %v388 = vunpack.c.l.b16 %v125
  %v389 = vunpack.c.l.b16 %v126
  %v390 = vunpack.c.l.b16 %v127
  %v391 = vunpack.c.l.b16 %v128
  %v392 = vunpack.c.l.b16 %v129
  %v393 = vunpack.c.l.b16 %v130
  %v394 = vunpack.c.l.b16 %v131
  %v395 = vunpack.c.l.b16 %v132
  %v396 = vunpack.c.l.b16 %v133
  %v397 = vunpack.c.l.b16 %v134
  %v398 = vunpack.c.l.b16 %v135
  %v399 = vunpack.c.l.b16 %v136
  %v400 = vunpack.c.l.b16 %v137
  %v401 = vunpack.c.l.b16 %v138
  %v402 = vunpack.c.l.b16 %v139
  %v403 = vunpack.c.l.b16 %v140
  %v404 = vunpack.c.l.b16 %v141
  %v405 = vunpack.c.l.b16 %v142
  %v406 = vunpack.c.l.b16 %v143
  %v407 = vunpack.c.l.b16 %v144
  %v408 = vunpack.c.l.b16 %v145
  %v409 = vunpack.c.l.b16 %v146
  %v410 = vunpack.c.l.b16 %v147
  %v411 = vunpack.c.l.b16 %v148
  %v412 = vunpack.c.l.b16 %v149
  %v413 = vunpack.c.l.b16 %v150
  %v414 = vunpack.c.l.b16 %v151
  %v415 = vunpack.c.l.b16 %v152
  %v416 = vunpack.c.l.b16 %v153
  %v417 = vunpack.c.l.b16 %v154
  %v418 = vunpack.c.l.b16 %v155
  %v419 = vunpack.c.l.b16 %v156
  %v420 = vunpack.c.l.b16 %v157
  %v421 = vunpack.c.l.b16 %v158
  %v422 = vunpack.c.l.b16 %v159
  %v423 = vunpack.c.l.b16 %v160
  %v424 = vunpack.c.l.b16 %v161
  %v425 = vunpack.c.l.b16 %v162
  %v426 = vunpack.c.l.b16 %v163
  %v427 = vunpack.c.l.b16 %v164
  %v428 = vunpack.c.l.b16 %v165
  %v429 = vunpack.c.l.b16 %v166
  %v430 = vunpack.c.l.b16 %v167
  %v431 = vunpack.c.l.b16 %v168
  %v432 = vunpack.c.l.b16 %v169
  %v433 = vunpack.c.l.b16 %v170
  %v434 = vunpack.c.l.b16 %v171
  %v435 = vunpack.c.l.b16 %v172
  %v436 = vunpack.c.l.b16 %v173
  %v437 = vunpack.c.l.b16 %v174
  %v438 = vunpack.c.l.b16 %v175
  %v439 = vunpack.c.l.b16 %v176
  %v440 = vunpack.c.l.b16 %v177
  %v441 = vunpack.c.l.b16 %v178
  %v442 = vunpack.c.l.b16 %v179
  %v443 = vunpack.c.l.b16 %v180
  %v444 = vunpack.c.l.b16 %v181
  %v445 = vunpack.c.l.b16 %v182
  %v446 = vunpack.c.l.b16 %v183
  %v447 = vunpack.c.l.b16 %v184
  %v448 = vunpack.c.l.b16 %v185
  %v449 = vunpack.c.l.b16 %v186
  %v450 = vunpack.c.l.b16 %v187
  %v451 = vunpack.c.l.b16 %v188
  %v452 = vunpack.c.l.b16 %v189
  %v453 = vunpack.c.l.b16 %v190
  %v454 = vunpack.c.l.b16 %v191
  %v455 = vunpack.c.l.b16 %v192
  %v456 = vunpack.c.l.b16 %v193
  %v457 = vunpack.c.l.b16 %v194
  %v458 = vunpack.c.l.b16 %v195
  %v459 = vunpack.c.l.b16 %v196
  %v460 = vunpack.c.l.b16 %v197
  %v461 = vunpack.c.l.b16 %v198
  %v462 = vunpack.c.l.b16 %v199
  %v463 = vunpack.c.l.b16 %v200
  %v464 = vpack.c.b16 %v337, %v336
  %v465 = vpack.c.b16 %v339, %v338
  %v466 = vpack.c.b16 %v341, %v340
  %v467 = vpack.c.b16 %v343, %v342
  %v468 = vpack.c.b16 %v345, %v344
  %v469 = vpack.c.b16 %v347, %v346
  %v470 = vpack.c.b16 %v349, %v348
  %v471 = vpack.c.b16 %v351, %v350
  %v472 = vpack.c.b16 %v353, %v352
  %v473 = vpack.c.b16 %v355, %v354
  %v474 = vpack.c.b16 %v357, %v356
  %v475 = vpack.c.b16 %v359, %v358
  %v476 = vpack.c.b16 %v361, %v360
  %v477 = vpack.c.b16 %v363, %v362
  %v478 = vpack.c.b16 %v365, %v364
  %v479 = vpack.c.b16 %v367, %v366
  %v480 = vpack.c.b16 %v369, %v368
  %v481 = vpack.c.b16 %v371, %v370
  %v482 = vpack.c.b16 %v373, %v372
  %v483 = vpack.c.b16 %v375, %v374
  %v484 = vpack.c.b16 %v377, %v376
  %v485 = vpack.c.b16 %v379, %v378
  %v486 = vpack.c.b16 %v381, %v380
  %v487 = vpack.c.b16 %v383, %v382
  %v488 = vpack.c.b16 %v385, %v384
  %v489 = vpack.c.b16 %v387, %v386
  %v490 = vpack.c.b16 %v389, %v388
  %v491 = vpack.c.b16 %v391, %v390
  %v492 = vpack.c.b16 %v393, %v392
  %v493 = vpack.c.b16 %v395, %v394
  %v494 = vpack.c.b16 %v397, %v396
  %v495 = vpack.c.b16 %v399, %v398
  %v496 = vpack.c.b16 %v401, %v400
  %v497 = vpack.c.b16 %v403, %v402
  %v498 = vpack.c.b16 %v405, %v404
  %v499 = vpack.c.b16 %v407, %v406
  %v500 = vpack.c.b16 %v409, %v408
  %v501 = vpack.c.b16 %v411, %v410
  %v502 = vpack.c.b16 %v413, %v412
  %v503 = vpack.c.b16 %v415, %v414
  %v504 = vpack.c.b16 %v417, %v416
  %v505 = vpack.c.b16 %v419, %v418
  %v506 = vpack.c.b16 %v421, %v420
  %v507 = vpack.c.b16 %v423, %v422
  %v508 = vpack.c.b16 %v425, %v424
  %v509 = vpack.c.b16 %v427, %v426
  %v510 = vpack.c.b16 %v429, %v428
  %v511 = vpack.c.b16 %v431, %v430
  %v512 = vpack.c.b16 %v433, %v432
  %v513 = vpack.c.b16 %v435, %v434
  %v514 = vpack.c.b16 %v437, %v436
  %v515 = vpack.c.b16 %v439, %v438
  %v516 = vpack.c.b16 %v441, %v440
  %v517 = vpack.c.b16 %v443, %v442
  %v518 = vpack.c.b16 %v445, %v444
  %v519 = vpack.c.b16 %v447, %v446
  %v520 = vpack.c.b16 %v449, %v448
  %v521 = vpack.c.b16 %v451, %v450
  %v522 = vpack.c.b16 %v453, %v452
  %v523 = vpack.c.b16 %v455, %v454
  %v524 = vpack.c.b16 %v457, %v456
  %v525 = vpack.c.b16 %v459, %v458
  %v526 = vpack.c.b16 %v461, %v460
  %v527 = vpack.c.b16 %v463, %v462
  %592 = vmatprep.subr.bf16.mxu0 0
  %593 = vmatpush1.bf16.msra.mxu0 %v464
  %594 = vmatprep.subr.bf16.mxu0 0
  %595 = vmatpush1.bf16.msra.mxu0 %v465
  %596 = vmatprep.subr.bf16.mxu0 0
  %597 = vmatpush1.bf16.msra.mxu0 %v466
  %598 = vmatprep.subr.bf16.mxu0 0
  %599 = vmatpush1.bf16.msra.mxu0 %v467
  %600 = vmatprep.subr.bf16.mxu0 0
  %601 = vmatpush1.bf16.msra.mxu0 %v468
  %602 = vmatprep.subr.bf16.mxu0 0
  %603 = vmatpush1.bf16.msra.mxu0 %v469
  %604 = vmatprep.subr.bf16.mxu0 0
  %605 = vmatpush1.bf16.msra.mxu0 %v470
  %606 = vmatprep.subr.bf16.mxu0 0
  %607 = vmatpush1.bf16.msra.mxu0 %v471
  %608 = vmatprep.subr.bf16.mxu0 0
  %609 = vmatpush1.bf16.msra.mxu0 %v472
  %610 = vmatprep.subr.bf16.mxu0 0
  %611 = vmatpush1.bf16.msra.mxu0 %v473
  %612 = vmatprep.subr.bf16.mxu0 0
  %613 = vmatpush1.bf16.msra.mxu0 %v474
  %614 = vmatprep.subr.bf16.mxu0 0
  %615 = vmatpush1.bf16.msra.mxu0 %v475
  %616 = vmatprep.subr.bf16.mxu0 0
  %617 = vmatpush1.bf16.msra.mxu0 %v476
  %618 = vmatprep.subr.bf16.mxu0 0
  %619 = vmatpush1.bf16.msra.mxu0 %v477
  %620 = vmatprep.subr.bf16.mxu0 0
  %621 = vmatpush1.bf16.msra.mxu0 %v478
  %622 = vmatprep.subr.bf16.mxu0 0
  %623 = vmatpush1.bf16.msra.mxu0 %v479
  %624 = vmatprep.mubr.bf16.mxu0 %v66
  %625 = vmatmul.mubr.bf16.gmra.mrb[0].mxu0 %v65
  %v626 = vpop.f32.mrb[0].mxu0
  %v627 = vadd.f32 %v206, %v626
  %v628 = vpop.f32.mrb[0].mxu0
  %v629 = vpop.f32.mrb[0].mxu0
  %v630 = vpop.f32.mrb[0].mxu0
  %631 = vdwg.mxu0
  %632 = vmatprep.subr.bf16.mxu0 0
  %633 = vmatpush1.bf16.msra.mxu0 %v480
  %634 = vmatprep.subr.bf16.mxu0 0
  %635 = vmatpush1.bf16.msra.mxu0 %v481
  %636 = vmatprep.subr.bf16.mxu0 0
  %637 = vmatpush1.bf16.msra.mxu0 %v482
  %638 = vmatprep.subr.bf16.mxu0 0
  %639 = vmatpush1.bf16.msra.mxu0 %v483
  %640 = vmatprep.subr.bf16.mxu0 0
  %641 = vmatpush1.bf16.msra.mxu0 %v484
  %642 = vmatprep.subr.bf16.mxu0 0
  %643 = vmatpush1.bf16.msra.mxu0 %v485
  %644 = vmatprep.subr.bf16.mxu0 0
  %645 = vmatpush1.bf16.msra.mxu0 %v486
  %646 = vmatprep.subr.bf16.mxu0 0
  %647 = vmatpush1.bf16.msra.mxu0 %v487
  %648 = vmatprep.subr.bf16.mxu0 0
  %649 = vmatpush1.bf16.msra.mxu0 %v488
  %650 = vmatprep.subr.bf16.mxu0 0
  %651 = vmatpush1.bf16.msra.mxu0 %v489
  %652 = vmatprep.subr.bf16.mxu0 0
  %653 = vmatpush1.bf16.msra.mxu0 %v490
  %654 = vmatprep.subr.bf16.mxu0 0
  %655 = vmatpush1.bf16.msra.mxu0 %v491
  %656 = vmatprep.subr.bf16.mxu0 0
  %657 = vmatpush1.bf16.msra.mxu0 %v492
  %658 = vmatprep.subr.bf16.mxu0 0
  %659 = vmatpush1.bf16.msra.mxu0 %v493
  %660 = vmatprep.subr.bf16.mxu0 0
  %661 = vmatpush1.bf16.msra.mxu0 %v494
  %662 = vmatprep.subr.bf16.mxu0 0
  %663 = vmatpush1.bf16.msra.mxu0 %v495
  %664 = vmatprep.mubr.bf16.mxu0 %v68
  %665 = vmatmul.mubr.bf16.gmra.mrb[0].mxu0 %v67
  %v666 = vpop.f32.mrb[0].mxu0
  %v667 = vadd.f32 %v627, %v666
  %v668 = vpop.f32.mrb[0].mxu0
  %v669 = vpop.f32.mrb[0].mxu0
  %v670 = vpop.f32.mrb[0].mxu0
  %671 = vdwg.mxu0
  %672 = vmatprep.subr.bf16.mxu0 0
  %673 = vmatpush1.bf16.msra.mxu0 %v496
  %674 = vmatprep.subr.bf16.mxu0 0
  %675 = vmatpush1.bf16.msra.mxu0 %v497
  %676 = vmatprep.subr.bf16.mxu0 0
  %677 = vmatpush1.bf16.msra.mxu0 %v498
  %678 = vmatprep.subr.bf16.mxu0 0
  %679 = vmatpush1.bf16.msra.mxu0 %v499
  %680 = vmatprep.subr.bf16.mxu0 0
  %681 = vmatpush1.bf16.msra.mxu0 %v500
  %682 = vmatprep.subr.bf16.mxu0 0
  %683 = vmatpush1.bf16.msra.mxu0 %v501
  %684 = vmatprep.subr.bf16.mxu0 0
  %685 = vmatpush1.bf16.msra.mxu0 %v502
  %686 = vmatprep.subr.bf16.mxu0 0
  %687 = vmatpush1.bf16.msra.mxu0 %v503
  %688 = vmatprep.subr.bf16.mxu0 0
  %689 = vmatpush1.bf16.msra.mxu0 %v504
  %690 = vmatprep.subr.bf16.mxu0 0
  %691 = vmatpush1.bf16.msra.mxu0 %v505
  %692 = vmatprep.subr.bf16.mxu0 0
  %693 = vmatpush1.bf16.msra.mxu0 %v506
  %694 = vmatprep.subr.bf16.mxu0 0
  %695 = vmatpush1.bf16.msra.mxu0 %v507
  %696 = vmatprep.subr.bf16.mxu0 0
  %697 = vmatpush1.bf16.msra.mxu0 %v508
  %698 = vmatprep.subr.bf16.mxu0 0
  %699 = vmatpush1.bf16.msra.mxu0 %v509
  %700 = vmatprep.subr.bf16.mxu0 0
  %701 = vmatpush1.bf16.msra.mxu0 %v510
  %702 = vmatprep.subr.bf16.mxu0 0
  %703 = vmatpush1.bf16.msra.mxu0 %v511
  %704 = vmatprep.mubr.bf16.mxu0 %v70
  %705 = vmatmul.mubr.bf16.gmra.mrb[0].mxu0 %v69
  %v706 = vpop.f32.mrb[0].mxu0
  %v707 = vadd.f32 %v667, %v706
  %v708 = vpop.f32.mrb[0].mxu0
  %v709 = vpop.f32.mrb[0].mxu0
  %v710 = vpop.f32.mrb[0].mxu0
  %711 = vdwg.mxu0
  %712 = vmatprep.subr.bf16.mxu0 0
  %713 = vmatpush1.bf16.msra.mxu0 %v512
  %714 = vmatprep.subr.bf16.mxu0 0
  %715 = vmatpush1.bf16.msra.mxu0 %v513
  %716 = vmatprep.subr.bf16.mxu0 0
  %717 = vmatpush1.bf16.msra.mxu0 %v514
  %718 = vmatprep.subr.bf16.mxu0 0
  %719 = vmatpush1.bf16.msra.mxu0 %v515
  %720 = vmatprep.subr.bf16.mxu0 0
  %721 = vmatpush1.bf16.msra.mxu0 %v516
  %722 = vmatprep.subr.bf16.mxu0 0
  %723 = vmatpush1.bf16.msra.mxu0 %v517
  %724 = vmatprep.subr.bf16.mxu0 0
  %725 = vmatpush1.bf16.msra.mxu0 %v518
  %726 = vmatprep.subr.bf16.mxu0 0
  %727 = vmatpush1.bf16.msra.mxu0 %v519
  %728 = vmatprep.subr.bf16.mxu0 0
  %729 = vmatpush1.bf16.msra.mxu0 %v520
  %730 = vmatprep.subr.bf16.mxu0 0
  %731 = vmatpush1.bf16.msra.mxu0 %v521
  %732 = vmatprep.subr.bf16.mxu0 0
  %733 = vmatpush1.bf16.msra.mxu0 %v522
  %734 = vmatprep.subr.bf16.mxu0 0
  %735 = vmatpush1.bf16.msra.mxu0 %v523
  %736 = vmatprep.subr.bf16.mxu0 0
  %737 = vmatpush1.bf16.msra.mxu0 %v524
  %738 = vmatprep.subr.bf16.mxu0 0
  %739 = vmatpush1.bf16.msra.mxu0 %v525
  %740 = vmatprep.subr.bf16.mxu0 0
  %741 = vmatpush1.bf16.msra.mxu0 %v526
  %742 = vmatprep.subr.bf16.mxu0 0
  %743 = vmatpush1.bf16.msra.mxu0 %v527
  %744 = vmatprep.mubr.bf16.mxu0 %v72
  %745 = vmatmul.mubr.bf16.gmra.mrb[0].mxu0 %v71
  %v746 = vpop.f32.mrb[0].mxu0
  %v747 = vadd.f32 %v707, %v746
  %v748 = vpop.f32.mrb[0].mxu0
  %v749 = vpop.f32.mrb[0].mxu0
  %v750 = vpop.f32.mrb[0].mxu0
  %751 = vdwg.mxu0
  %v752 = vmax.f32 %v747, 0.0
  %v753 = vpack.c.bf16 %v752, %v752
  %v754 = vld [vmem:[%s3] sm:$0xf]
  %v755 = vld [vmem:[%s3 + $0x4] sm:$0xf]
  %v756 = vld [vmem:[%s3 + $0x8] sm:$0xf]
  %v757 = vld [vmem:[%s3 + $0xc] sm:$0xf]
  %v758 = vld [vmem:[%s3 + $0x10] sm:$0xf]
  %v759 = vld [vmem:[%s3 + $0x14] sm:$0xf]
  %v760 = vld [vmem:[%s3 + $0x18] sm:$0xf]
  %v761 = vld [vmem:[%s3 + $0x1c] sm:$0xf]
  %v762 = vld [vmem:[%s3 + $0x20] sm:$0xf]
  %v763 = vld [vmem:[%s3 + $0x24] sm:$0xf]
  %v764 = vld [vmem:[%s3 + $0x28] sm:$0xf]
  %v765 = vld [vmem:[%s3 + $0x2c] sm:$0xf]
  %v766 = vld [vmem:[%s3 + $0x30] sm:$0xf]
  %v767 = vld [vmem:[%s3 + $0x34] sm:$0xf]
  %v768 = vld [vmem:[%s3 + $0x38] sm:$0xf]
  %v769 = vld [vmem:[%s3 + $0x3c] sm:$0xf]
  %v770 = vld [vmem:[%s4] sm:$0x1]
  %v772 = vlaneseq
  %v773 = vshrl.u32 %v772, 7
  %v774 = vsub.s32 0, %v773
  %v775 = vrot.slane %v770, %v774
  %v793 = vunpack.c.l.b16 %v754
  %v794 = vunpack.c.l.b16 %v755
  %v795 = vunpack.c.l.b16 %v756
  %v796 = vunpack.c.l.b16 %v757
  %v797 = vunpack.c.l.b16 %v758
  %v798 = vunpack.c.l.b16 %v759
  %v799 = vunpack.c.l.b16 %v760
  %v800 = vunpack.c.l.b16 %v761
  %v801 = vunpack.c.l.b16 %v762
  %v802 = vunpack.c.l.b16 %v763
  %v803 = vunpack.c.l.b16 %v764
  %v804 = vunpack.c.l.b16 %v765
  %v805 = vunpack.c.l.b16 %v766
  %v806 = vunpack.c.l.b16 %v767
  %v807 = vunpack.c.l.b16 %v768
  %v808 = vunpack.c.l.b16 %v769
  %v809 = vpack.c.b16 %v794, %v793
  %v810 = vpack.c.b16 %v796, %v795
  %v811 = vpack.c.b16 %v798, %v797
  %v812 = vpack.c.b16 %v800, %v799
  %v813 = vpack.c.b16 %v802, %v801
  %v814 = vpack.c.b16 %v804, %v803
  %v815 = vpack.c.b16 %v806, %v805
  %v816 = vpack.c.b16 %v808, %v807
  %825 = vmatprep.subr.bf16.mxu0 0
  %826 = vmatpush1.bf16.msra.mxu0 %v809
  %827 = vmatprep.subr.bf16.mxu0 0
  %828 = vmatpush1.bf16.msra.mxu0 %v810
  %829 = vmatprep.subr.bf16.mxu0 0
  %830 = vmatpush1.bf16.msra.mxu0 %v811
  %831 = vmatprep.subr.bf16.mxu0 0
  %832 = vmatpush1.bf16.msra.mxu0 %v812
  %833 = vmatprep.subr.bf16.mxu0 0
  %834 = vmatpush1.bf16.msra.mxu0 %v813
  %835 = vmatprep.subr.bf16.mxu0 0
  %836 = vmatpush1.bf16.msra.mxu0 %v814
  %837 = vmatprep.subr.bf16.mxu0 0
  %838 = vmatpush1.bf16.msra.mxu0 %v815
  %839 = vmatprep.subr.bf16.mxu0 0
  %840 = vmatpush1.bf16.msra.mxu0 %v816
  %841 = vmatprep.subr.bf16.mxu0 0
  %842 = vmatpush1.bf16.msra.mxu0 0
  %843 = vmatprep.subr.bf16.mxu0 0
  %844 = vmatpush1.bf16.msra.mxu0 0
  %845 = vmatprep.subr.bf16.mxu0 0
  %846 = vmatpush1.bf16.msra.mxu0 0
  %847 = vmatprep.subr.bf16.mxu0 0
  %848 = vmatpush1.bf16.msra.mxu0 0
  %849 = vmatprep.subr.bf16.mxu0 0
  %850 = vmatpush1.bf16.msra.mxu0 0
  %851 = vmatprep.subr.bf16.mxu0 0
  %852 = vmatpush1.bf16.msra.mxu0 0
  %853 = vmatprep.subr.bf16.mxu0 0
  %854 = vmatpush1.bf16.msra.mxu0 0
  %855 = vmatprep.subr.bf16.mxu0 0
  %856 = vmatpush1.bf16.msra.mxu0 0
  %857 = vmatprep.mubr.bf16.mxu0 0
  %858 = vmatmul.mubr.bf16.gmra.mrb[0].mxu0 %v753
  %v859 = vpop.f32.mrb[0].mxu0
  %v860 = vadd.f32 %v775, %v859
  %v861 = vpop.f32.mrb[0].mxu0
  %v862 = vpop.f32.mrb[0].mxu0
  %v863 = vpop.f32.mrb[0].mxu0
  %864 = vdwg.mxu0
  %v865 = vmax.f32 %v860, 0.0
  %v866 = vpack.c.bf16 %v865, %v865
  %v867 = vld [vmem:[%s5] sm:$0xf]
  %v868 = vld [vmem:[%s5 + $0x4] sm:$0xf]
  %v869 = vld [vmem:[%s5 + $0x8] sm:$0xf]
  %v870 = vld [vmem:[%s5 + $0xc] sm:$0xf]
  %v871 = vld [vmem:[%s5 + $0x10] sm:$0xf]
  %v872 = vld [vmem:[%s5 + $0x14] sm:$0xf]
  %v873 = vld [vmem:[%s5 + $0x18] sm:$0xf]
  %v874 = vld [vmem:[%s5 + $0x1c] sm:$0xf]
  %v875 = vld [vmem:[%s6] sm:$0x1]
  %v877 = vlaneseq
  %v878 = vshrl.u32 %v877, 7
  %v879 = vsub.s32 0, %v878
  %v880 = vrot.slane %v875, %v879
  %v890 = vunpack.c.l.b16 %v867
  %v891 = vunpack.c.l.b16 %v868
  %v892 = vunpack.c.l.b16 %v869
  %v893 = vunpack.c.l.b16 %v870
  %v894 = vunpack.c.l.b16 %v871
  %v895 = vunpack.c.l.b16 %v872
  %v896 = vunpack.c.l.b16 %v873
  %v897 = vunpack.c.l.b16 %v874
  %v898 = vpack.c.b16 %v891, %v890
  %v899 = vpack.c.b16 %v893, %v892
  %v900 = vpack.c.b16 %v895, %v894
  %v901 = vpack.c.b16 %v897, %v896
  %vm906 = vcmask 523264
  %v908 = vsel %vm906, %v866, 0
  %910 = vmatprep.subr.bf16.mxu0 0
  %911 = vmatpush1.bf16.msra.mxu0 %v898
  %912 = vmatprep.subr.bf16.mxu0 0
  %913 = vmatpush1.bf16.msra.mxu0 %v899
  %914 = vmatprep.subr.bf16.mxu0 0
  %915 = vmatpush1.bf16.msra.mxu0 %v900
  %916 = vmatprep.subr.bf16.mxu0 0
  %917 = vmatpush1.bf16.msra.mxu0 %v901
  %918 = vmatprep.subr.bf16.mxu0 0
  %919 = vmatpush1.bf16.msra.mxu0 0
  %920 = vmatprep.subr.bf16.mxu0 0
  %921 = vmatpush1.bf16.msra.mxu0 0
  %922 = vmatprep.subr.bf16.mxu0 0
  %923 = vmatpush1.bf16.msra.mxu0 0
  %924 = vmatprep.subr.bf16.mxu0 0
  %925 = vmatpush1.bf16.msra.mxu0 0
  %926 = vmatprep.subr.bf16.mxu0 0
  %927 = vmatpush1.bf16.msra.mxu0 0
  %928 = vmatprep.subr.bf16.mxu0 0
  %929 = vmatpush1.bf16.msra.mxu0 0
  %930 = vmatprep.subr.bf16.mxu0 0
  %931 = vmatpush1.bf16.msra.mxu0 0
  %932 = vmatprep.subr.bf16.mxu0 0
  %933 = vmatpush1.bf16.msra.mxu0 0
  %934 = vmatprep.subr.bf16.mxu0 0
  %935 = vmatpush1.bf16.msra.mxu0 0
  %936 = vmatprep.subr.bf16.mxu0 0
  %937 = vmatpush1.bf16.msra.mxu0 0
  %938 = vmatprep.subr.bf16.mxu0 0
  %939 = vmatpush1.bf16.msra.mxu0 0
  %940 = vmatprep.subr.bf16.mxu0 0
  %941 = vmatpush1.bf16.msra.mxu0 0
  %942 = vmatprep.mubr.bf16.mxu0 0
  %943 = vmatmul.mubr.bf16.gmra.mrb[0].mxu0 %v908
  %v944 = vpop.f32.mrb[0].mxu0
  %v945 = vadd.f32 %v880, %v944
  %v946 = vpop.f32.mrb[0].mxu0
  %v947 = vpop.f32.mrb[0].mxu0
  %v948 = vpop.f32.mrb[0].mxu0
  %949 = vdwg.mxu0
  %v950 = vmax.f32 %v945, 0.0
  %v951 = vpack.c.bf16 %v950, %v950
  %v952 = vld [vmem:[%s7] sm:$0xf]
  %v953 = vld [vmem:[%s7 + $0x4] sm:$0x3]
  %v954 = vld [vmem:[%s8] sm:$0x1]
  %v956 = vlaneseq
  %v957 = vshrl.u32 %v956, 7
  %v958 = vsub.s32 0, %v957
  %v959 = vrot.slane %v954, %v958
  %v963 = vunpack.c.l.b16 %v952
  %v964 = vunpack.c.l.b16 %v953
  %v965 = vpack.c.b16 %v964, %v963
  %vm966 = vcmask 97280
  %v968 = vsel %vm966, %v951, 0
  %vm970 = vcmask 1045504
  %v972 = vsel %vm970, %v965, 0
  %974 = vmatprep.subr.bf16.mxu0 0
  %975 = vmatpush1.bf16.msra.mxu0 %v972
  %976 = vmatprep.subr.bf16.mxu0 0
  %977 = vmatpush1.bf16.msra.mxu0 0
  %978 = vmatprep.subr.bf16.mxu0 0
  %979 = vmatpush1.bf16.msra.mxu0 0
  %980 = vmatprep.subr.bf16.mxu0 0
  %981 = vmatpush1.bf16.msra.mxu0 0
  %982 = vmatprep.subr.bf16.mxu0 0
  %983 = vmatpush1.bf16.msra.mxu0 0
  %984 = vmatprep.subr.bf16.mxu0 0
  %985 = vmatpush1.bf16.msra.mxu0 0
  %986 = vmatprep.subr.bf16.mxu0 0
  %987 = vmatpush1.bf16.msra.mxu0 0
  %988 = vmatprep.subr.bf16.mxu0 0
  %989 = vmatpush1.bf16.msra.mxu0 0
  %990 = vmatprep.subr.bf16.mxu0 0
  %991 = vmatpush1.bf16.msra.mxu0 0
  %992 = vmatprep.subr.bf16.mxu0 0
  %993 = vmatpush1.bf16.msra.mxu0 0
  %994 = vmatprep.subr.bf16.mxu0 0
  %995 = vmatpush1.bf16.msra.mxu0 0
  %996 = vmatprep.subr.bf16.mxu0 0
  %997 = vmatpush1.bf16.msra.mxu0 0
  %998 = vmatprep.subr.bf16.mxu0 0
  %999 = vmatpush1.bf16.msra.mxu0 0
  %1000 = vmatprep.subr.bf16.mxu0 0
  %1001 = vmatpush1.bf16.msra.mxu0 0
  %1002 = vmatprep.subr.bf16.mxu0 0
  %1003 = vmatpush1.bf16.msra.mxu0 0
  %1004 = vmatprep.subr.bf16.mxu0 0
  %1005 = vmatpush1.bf16.msra.mxu0 0
  %1006 = vmatprep.mubr.bf16.mxu0 0
  %1007 = vmatmul.mubr.bf16.gmra.mrb[0].mxu0 %v968
  %v1008 = vpop.f32.mrb[0].mxu0
  %v1009 = vadd.f32 %v959, %v1008
  %v1010 = vpop.f32.mrb[0].mxu0
  %v1011 = vpop.f32.mrb[0].mxu0
  %v1012 = vpop.f32.mrb[0].mxu0
  %1013 = vdwg.mxu0
  %v1014 = vpack.c.bf16 %v1009, %v1009
  %v1015 = vld [vmem:[%s9] sm:$0x3]
  %v1016 = vld [vmem:[%s10] sm:$0x1]
  %v1018 = vlaneseq
  %v1019 = vshrl.u32 %v1018, 7
  %v1020 = vsub.s32 0, %v1019
  %v1021 = vrot.slane %v1016, %v1020
  %vm1023 = vcmask 23552
  %v1025 = vsel %vm1023, %v1014, 0
  %vm1027 = vcmask 1040384
  %vm1028 = vcmask 1041408
  %v1029 = vsel %vm1027, 4294967295, 65535
  %v1030 = vsel %vm1028, %v1029, 0
  %v1032 = vand.u32 %v1015, %v1030
  %1034 = vmatprep.subr.bf16.mxu0 0
  %1035 = vmatpush1.bf16.msra.mxu0 %v1032
  %1036 = vmatprep.subr.bf16.mxu0 0
  %1037 = vmatpush1.bf16.msra.mxu0 0
  %1038 = vmatprep.subr.bf16.mxu0 0
  %1039 = vmatpush1.bf16.msra.mxu0 0
  %1040 = vmatprep.subr.bf16.mxu0 0
  %1041 = vmatpush1.bf16.msra.mxu0 0
  %1042 = vmatprep.subr.bf16.mxu0 0
  %1043 = vmatpush1.bf16.msra.mxu0 0
  %1044 = vmatprep.subr.bf16.mxu0 0
  %1045 = vmatpush1.bf16.msra.mxu0 0
  %1046 = vmatprep.subr.bf16.mxu0 0
  %1047 = vmatpush1.bf16.msra.mxu0 0
  %1048 = vmatprep.subr.bf16.mxu0 0
  %1049 = vmatpush1.bf16.msra.mxu0 0
  %1050 = vmatprep.subr.bf16.mxu0 0
  %1051 = vmatpush1.bf16.msra.mxu0 0
  %1052 = vmatprep.subr.bf16.mxu0 0
  %1053 = vmatpush1.bf16.msra.mxu0 0
  %1054 = vmatprep.subr.bf16.mxu0 0
  %1055 = vmatpush1.bf16.msra.mxu0 0
  %1056 = vmatprep.subr.bf16.mxu0 0
  %1057 = vmatpush1.bf16.msra.mxu0 0
  %1058 = vmatprep.subr.bf16.mxu0 0
  %1059 = vmatpush1.bf16.msra.mxu0 0
  %1060 = vmatprep.subr.bf16.mxu0 0
  %1061 = vmatpush1.bf16.msra.mxu0 0
  %1062 = vmatprep.subr.bf16.mxu0 0
  %1063 = vmatpush1.bf16.msra.mxu0 0
  %1064 = vmatprep.subr.bf16.mxu0 0
  %1065 = vmatpush1.bf16.msra.mxu0 0
  %1066 = vmatprep.mubr.bf16.mxu0 0
  %1067 = vmatmul.mubr.bf16.gmra.mrb[0].mxu0 %v1025
  %v1068 = vpop.f32.mrb[0].mxu0
  %v1069 = vadd.f32 %v1021, %v1068
  %v1070 = vpop.f32.mrb[0].mxu0
  %v1071 = vpop.f32.mrb[0].mxu0
  %v1072 = vpop.f32.mrb[0].mxu0
  %1073 = vdwg.mxu0
  %v1074 = vmax.f32 %v1069, 0.0
  %v1075 = vpack.c.bf16 %v1074, %v1074
  %v1076 = vld [vmem:[%s11] sm:$0xf]
  %v1077 = vld [vmem:[%s11 + $0x4] sm:$0x3]
  %v1078 = vld [vmem:[%s12] sm:$0x1]
  %v1080 = vlaneseq
  %v1081 = vshrl.u32 %v1080, 7
  %v1082 = vsub.s32 0, %v1081
  %v1083 = vrot.slane %v1078, %v1082
  %v1087 = vunpack.c.l.b16 %v1076
  %v1088 = vunpack.c.l.b16 %v1077
  %v1089 = vpack.c.b16 %v1088, %v1087
  %v1091 = vsel %vm966, %v1075, 0
  %v1094 = vsel %vm970, %v1089, 0
  %1096 = vmatprep.subr.bf16.mxu0 0
  %1097 = vmatpush1.bf16.msra.mxu0 %v1094
  %1098 = vmatprep.subr.bf16.mxu0 0
  %1099 = vmatpush1.bf16.msra.mxu0 0
  %1100 = vmatprep.subr.bf16.mxu0 0
  %1101 = vmatpush1.bf16.msra.mxu0 0
  %1102 = vmatprep.subr.bf16.mxu0 0
  %1103 = vmatpush1.bf16.msra.mxu0 0
  %1104 = vmatprep.subr.bf16.mxu0 0
  %1105 = vmatpush1.bf16.msra.mxu0 0
  %1106 = vmatprep.subr.bf16.mxu0 0
  %1107 = vmatpush1.bf16.msra.mxu0 0
  %1108 = vmatprep.subr.bf16.mxu0 0
  %1109 = vmatpush1.bf16.msra.mxu0 0
  %1110 = vmatprep.subr.bf16.mxu0 0
  %1111 = vmatpush1.bf16.msra.mxu0 0
  %1112 = vmatprep.subr.bf16.mxu0 0
  %1113 = vmatpush1.bf16.msra.mxu0 0
  %1114 = vmatprep.subr.bf16.mxu0 0
  %1115 = vmatpush1.bf16.msra.mxu0 0
  %1116 = vmatprep.subr.bf16.mxu0 0
  %1117 = vmatpush1.bf16.msra.mxu0 0
  %1118 = vmatprep.subr.bf16.mxu0 0
  %1119 = vmatpush1.bf16.msra.mxu0 0
  %1120 = vmatprep.subr.bf16.mxu0 0
  %1121 = vmatpush1.bf16.msra.mxu0 0
  %1122 = vmatprep.subr.bf16.mxu0 0
  %1123 = vmatpush1.bf16.msra.mxu0 0
  %1124 = vmatprep.subr.bf16.mxu0 0
  %1125 = vmatpush1.bf16.msra.mxu0 0
  %1126 = vmatprep.subr.bf16.mxu0 0
  %1127 = vmatpush1.bf16.msra.mxu0 0
  %1128 = vmatprep.mubr.bf16.mxu0 0
  %1129 = vmatmul.mubr.bf16.gmra.mrb[0].mxu0 %v1091
  %v1130 = vpop.f32.mrb[0].mxu0
  %v1131 = vadd.f32 %v1083, %v1130
  %v1132 = vpop.f32.mrb[0].mxu0
  %v1133 = vpop.f32.mrb[0].mxu0
  %v1134 = vpop.f32.mrb[0].mxu0
  %1135 = vdwg.mxu0
  %v1136 = vmax.f32 %v1131, 0.0
  %v1137 = vpack.c.bf16 %v1136, %v1136
  %v1138 = vld [vmem:[%s13] sm:$0xf]
  %v1139 = vld [vmem:[%s13 + $0x4] sm:$0xf]
  %v1140 = vld [vmem:[%s13 + $0x8] sm:$0xf]
  %v1141 = vld [vmem:[%s13 + $0xc] sm:$0xf]
  %v1142 = vld [vmem:[%s13 + $0x10] sm:$0xf]
  %v1143 = vld [vmem:[%s13 + $0x14] sm:$0xf]
  %v1144 = vld [vmem:[%s13 + $0x18] sm:$0xf]
  %v1145 = vld [vmem:[%s13 + $0x1c] sm:$0xf]
  %v1146 = vld [vmem:[%s14] sm:$0x1]
  %v1148 = vlaneseq
  %v1149 = vshrl.u32 %v1148, 7
  %v1150 = vsub.s32 0, %v1149
  %v1151 = vrot.slane %v1146, %v1150
  %v1161 = vunpack.c.l.b16 %v1138
  %v1162 = vunpack.c.l.b16 %v1139
  %v1163 = vunpack.c.l.b16 %v1140
  %v1164 = vunpack.c.l.b16 %v1141
  %v1165 = vunpack.c.l.b16 %v1142
  %v1166 = vunpack.c.l.b16 %v1143
  %v1167 = vunpack.c.l.b16 %v1144
  %v1168 = vunpack.c.l.b16 %v1145
  %v1169 = vpack.c.b16 %v1162, %v1161
  %v1170 = vpack.c.b16 %v1164, %v1163
  %v1171 = vpack.c.b16 %v1166, %v1165
  %v1172 = vpack.c.b16 %v1168, %v1167
  %v1178 = vsel %vm906, %v1137, 0
  %1180 = vmatprep.subr.bf16.mxu0 0
  %1181 = vmatpush1.bf16.msra.mxu0 %v1169
  %1182 = vmatprep.subr.bf16.mxu0 0
  %1183 = vmatpush1.bf16.msra.mxu0 %v1170
  %1184 = vmatprep.subr.bf16.mxu0 0
  %1185 = vmatpush1.bf16.msra.mxu0 %v1171
  %1186 = vmatprep.subr.bf16.mxu0 0
  %1187 = vmatpush1.bf16.msra.mxu0 %v1172
  %1188 = vmatprep.subr.bf16.mxu0 0
  %1189 = vmatpush1.bf16.msra.mxu0 0
  %1190 = vmatprep.subr.bf16.mxu0 0
  %1191 = vmatpush1.bf16.msra.mxu0 0
  %1192 = vmatprep.subr.bf16.mxu0 0
  %1193 = vmatpush1.bf16.msra.mxu0 0
  %1194 = vmatprep.subr.bf16.mxu0 0
  %1195 = vmatpush1.bf16.msra.mxu0 0
  %1196 = vmatprep.subr.bf16.mxu0 0
  %1197 = vmatpush1.bf16.msra.mxu0 0
  %1198 = vmatprep.subr.bf16.mxu0 0
  %1199 = vmatpush1.bf16.msra.mxu0 0
  %1200 = vmatprep.subr.bf16.mxu0 0
  %1201 = vmatpush1.bf16.msra.mxu0 0
  %1202 = vmatprep.subr.bf16.mxu0 0
  %1203 = vmatpush1.bf16.msra.mxu0 0
  %1204 = vmatprep.subr.bf16.mxu0 0
  %1205 = vmatpush1.bf16.msra.mxu0 0
  %1206 = vmatprep.subr.bf16.mxu0 0
  %1207 = vmatpush1.bf16.msra.mxu0 0
  %1208 = vmatprep.subr.bf16.mxu0 0
  %1209 = vmatpush1.bf16.msra.mxu0 0
  %1210 = vmatprep.subr.bf16.mxu0 0
  %1211 = vmatpush1.bf16.msra.mxu0 0
  %1212 = vmatprep.mubr.bf16.mxu0 0
  %1213 = vmatmul.mubr.bf16.gmra.mrb[0].mxu0 %v1178
  %v1214 = vpop.f32.mrb[0].mxu0
  %v1215 = vadd.f32 %v1151, %v1214
  %v1216 = vpop.f32.mrb[0].mxu0
  %v1217 = vpop.f32.mrb[0].mxu0
  %v1218 = vpop.f32.mrb[0].mxu0
  %1219 = vdwg.mxu0
  %v1220 = vmax.f32 %v1215, 0.0
  %v1221 = vpack.c.bf16 %v1220, %v1220
  %v1222 = vld [vmem:[%s15] sm:$0xff]
  %v1223 = vld [vmem:[%s15 + $0x8] sm:$0xff]
  %v1224 = vld [vmem:[%s15 + $0x10] sm:$0xff]
  %v1225 = vld [vmem:[%s15 + $0x18] sm:$0xff]
  %v1226 = vld [vmem:[%s15 + $0x20] sm:$0xff]
  %v1227 = vld [vmem:[%s15 + $0x28] sm:$0xff]
  %v1228 = vld [vmem:[%s15 + $0x30] sm:$0xff]
  %v1229 = vld [vmem:[%s15 + $0x38] sm:$0xff]
  %v1230 = vld [vmem:[%s15 + $0x40] sm:$0xff]
  %v1231 = vld [vmem:[%s15 + $0x48] sm:$0xff]
  %v1232 = vld [vmem:[%s15 + $0x50] sm:$0xff]
  %v1233 = vld [vmem:[%s15 + $0x58] sm:$0xff]
  %v1234 = vld [vmem:[%s15 + $0x60] sm:$0xff]
  %v1235 = vld [vmem:[%s15 + $0x68] sm:$0xff]
  %v1236 = vld [vmem:[%s15 + $0x70] sm:$0xff]
  %v1237 = vld [vmem:[%s15 + $0x78] sm:$0xff]
  %v1238 = vld [vmem:[%s15 + $0x80] sm:$0xff]
  %v1239 = vld [vmem:[%s15 + $0x88] sm:$0xff]
  %v1240 = vld [vmem:[%s15 + $0x90] sm:$0xff]
  %v1241 = vld [vmem:[%s15 + $0x98] sm:$0xff]
  %v1242 = vld [vmem:[%s15 + $0xa0] sm:$0xff]
  %v1243 = vld [vmem:[%s15 + $0xa8] sm:$0xff]
  %v1244 = vld [vmem:[%s15 + $0xb0] sm:$0xff]
  %v1245 = vld [vmem:[%s15 + $0xb8] sm:$0xff]
  %v1246 = vld [vmem:[%s15 + $0xc0] sm:$0xff]
  %v1247 = vld [vmem:[%s15 + $0xc8] sm:$0xff]
  %v1248 = vld [vmem:[%s15 + $0xd0] sm:$0xff]
  %v1249 = vld [vmem:[%s15 + $0xd8] sm:$0xff]
  %v1250 = vld [vmem:[%s15 + $0xe0] sm:$0xff]
  %v1251 = vld [vmem:[%s15 + $0xe8] sm:$0xff]
  %v1252 = vld [vmem:[%s15 + $0xf0] sm:$0xff]
  %v1253 = vld [vmem:[%s15 + $0xf8] sm:$0xff]
  %v1254 = vld [vmem:[%s15 + $0x100] sm:$0xff]
  %v1255 = vld [vmem:[%s15 + $0x108] sm:$0xff]
  %v1256 = vld [vmem:[%s15 + $0x110] sm:$0xff]
  %v1257 = vld [vmem:[%s15 + $0x118] sm:$0xff]
  %v1258 = vld [vmem:[%s15 + $0x120] sm:$0xff]
  %v1259 = vld [vmem:[%s15 + $0x128] sm:$0xff]
  %v1260 = vld [vmem:[%s15 + $0x130] sm:$0xff]
  %v1261 = vld [vmem:[%s15 + $0x138] sm:$0xff]
  %v1262 = vld [vmem:[%s15 + $0x140] sm:$0xff]
  %v1263 = vld [vmem:[%s15 + $0x148] sm:$0xff]
  %v1264 = vld [vmem:[%s15 + $0x150] sm:$0xff]
  %v1265 = vld [vmem:[%s15 + $0x158] sm:$0xff]
  %v1266 = vld [vmem:[%s15 + $0x160] sm:$0xff]
  %v1267 = vld [vmem:[%s15 + $0x168] sm:$0xff]
  %v1268 = vld [vmem:[%s15 + $0x170] sm:$0xff]
  %v1269 = vld [vmem:[%s15 + $0x178] sm:$0xff]
  %v1270 = vld [vmem:[%s15 + $0x180] sm:$0xff]
  %v1271 = vld [vmem:[%s15 + $0x188] sm:$0xff]
  %v1272 = vld [vmem:[%s15 + $0x190] sm:$0xff]
  %v1273 = vld [vmem:[%s15 + $0x198] sm:$0xff]
  %v1274 = vld [vmem:[%s15 + $0x1a0] sm:$0xff]
  %v1275 = vld [vmem:[%s15 + $0x1a8] sm:$0xff]
  %v1276 = vld [vmem:[%s15 + $0x1b0] sm:$0xff]
  %v1277 = vld [vmem:[%s15 + $0x1b8] sm:$0xff]
  %v1278 = vld [vmem:[%s15 + $0x1c0] sm:$0xff]
  %v1279 = vld [vmem:[%s15 + $0x1c8] sm:$0xff]
  %v1280 = vld [vmem:[%s15 + $0x1d0] sm:$0xff]
  %v1281 = vld [vmem:[%s15 + $0x1d8] sm:$0xff]
  %v1282 = vld [vmem:[%s15 + $0x1e0] sm:$0xff]
  %v1283 = vld [vmem:[%s15 + $0x1e8] sm:$0xff]
  %v1284 = vld [vmem:[%s15 + $0x1f0] sm:$0xff]
  %v1285 = vld [vmem:[%s15 + $0x1f8] sm:$0xff]
  %v1286 = vld [vmem:[%s16] sm:$0xff]
  %v1288 = vlaneseq
  %v1289 = vshrl.u32 %v1288, 7
  %v1290 = vsub.s32 0, %v1289
  %v1291 = vrot.slane %v1286, %v1290
  %v1292 = vlaneseq
  %v1293 = vshrl.u32 %v1292, 7
  %v1294 = vsub.s32 1, %v1293
  %v1295 = vrot.slane %v1286, %v1294
  %v1296 = vlaneseq
  %v1297 = vshrl.u32 %v1296, 7
  %v1298 = vsub.s32 2, %v1297
  %v1299 = vrot.slane %v1286, %v1298
  %v1300 = vlaneseq
  %v1301 = vshrl.u32 %v1300, 7
  %v1302 = vsub.s32 3, %v1301
  %v1303 = vrot.slane %v1286, %v1302
  %v1304 = vlaneseq
  %v1305 = vshrl.u32 %v1304, 7
  %v1306 = vsub.s32 4, %v1305
  %v1307 = vrot.slane %v1286, %v1306
  %v1308 = vlaneseq
  %v1309 = vshrl.u32 %v1308, 7
  %v1310 = vsub.s32 5, %v1309
  %v1311 = vrot.slane %v1286, %v1310
  %v1312 = vlaneseq
  %v1313 = vshrl.u32 %v1312, 7
  %v1314 = vsub.s32 6, %v1313
  %v1315 = vrot.slane %v1286, %v1314
  %v1316 = vlaneseq
  %v1317 = vshrl.u32 %v1316, 7
  %v1318 = vsub.s32 7, %v1317
  %v1319 = vrot.slane %v1286, %v1318
  %v1392 = vunpack.c.l.b16 %v1222
  %v1393 = vunpack.c.h.b16 %v1222
  %v1394 = vunpack.c.l.b16 %v1223
  %v1395 = vunpack.c.h.b16 %v1223
  %v1396 = vunpack.c.l.b16 %v1224
  %v1397 = vunpack.c.h.b16 %v1224
  %v1398 = vunpack.c.l.b16 %v1225
  %v1399 = vunpack.c.h.b16 %v1225
  %v1400 = vunpack.c.l.b16 %v1226
  %v1401 = vunpack.c.h.b16 %v1226
  %v1402 = vunpack.c.l.b16 %v1227
  %v1403 = vunpack.c.h.b16 %v1227
  %v1404 = vunpack.c.l.b16 %v1228
  %v1405 = vunpack.c.h.b16 %v1228
  %v1406 = vunpack.c.l.b16 %v1229
  %v1407 = vunpack.c.h.b16 %v1229
  %v1408 = vunpack.c.l.b16 %v1230
  %v1409 = vunpack.c.h.b16 %v1230
  %v1410 = vunpack.c.l.b16 %v1231
  %v1411 = vunpack.c.h.b16 %v1231
  %v1412 = vunpack.c.l.b16 %v1232
  %v1413 = vunpack.c.h.b16 %v1232
  %v1414 = vunpack.c.l.b16 %v1233
  %v1415 = vunpack.c.h.b16 %v1233
  %v1416 = vunpack.c.l.b16 %v1234
  %v1417 = vunpack.c.h.b16 %v1234
  %v1418 = vunpack.c.l.b16 %v1235
  %v1419 = vunpack.c.h.b16 %v1235
  %v1420 = vunpack.c.l.b16 %v1236
  %v1421 = vunpack.c.h.b16 %v1236
  %v1422 = vunpack.c.l.b16 %v1237
  %v1423 = vunpack.c.h.b16 %v1237
  %v1424 = vunpack.c.l.b16 %v1238
  %v1425 = vunpack.c.h.b16 %v1238
  %v1426 = vunpack.c.l.b16 %v1239
  %v1427 = vunpack.c.h.b16 %v1239
  %v1428 = vunpack.c.l.b16 %v1240
  %v1429 = vunpack.c.h.b16 %v1240
  %v1430 = vunpack.c.l.b16 %v1241
  %v1431 = vunpack.c.h.b16 %v1241
  %v1432 = vunpack.c.l.b16 %v1242
  %v1433 = vunpack.c.h.b16 %v1242
  %v1434 = vunpack.c.l.b16 %v1243
  %v1435 = vunpack.c.h.b16 %v1243
  %v1436 = vunpack.c.l.b16 %v1244
  %v1437 = vunpack.c.h.b16 %v1244
  %v1438 = vunpack.c.l.b16 %v1245
  %v1439 = vunpack.c.h.b16 %v1245
  %v1440 = vunpack.c.l.b16 %v1246
  %v1441 = vunpack.c.h.b16 %v1246
  %v1442 = vunpack.c.l.b16 %v1247
  %v1443 = vunpack.c.h.b16 %v1247
  %v1444 = vunpack.c.l.b16 %v1248
  %v1445 = vunpack.c.h.b16 %v1248
  %v1446 = vunpack.c.l.b16 %v1249
  %v1447 = vunpack.c.h.b16 %v1249
  %v1448 = vunpack.c.l.b16 %v1250
  %v1449 = vunpack.c.h.b16 %v1250
  %v1450 = vunpack.c.l.b16 %v1251
  %v1451 = vunpack.c.h.b16 %v1251
  %v1452 = vunpack.c.l.b16 %v1252
  %v1453 = vunpack.c.h.b16 %v1252
  %v1454 = vunpack.c.l.b16 %v1253
  %v1455 = vunpack.c.h.b16 %v1253
  %v1456 = vunpack.c.l.b16 %v1254
  %v1457 = vunpack.c.h.b16 %v1254
  %v1458 = vunpack.c.l.b16 %v1255
  %v1459 = vunpack.c.h.b16 %v1255
  %v1460 = vunpack.c.l.b16 %v1256
  %v1461 = vunpack.c.h.b16 %v1256
  %v1462 = vunpack.c.l.b16 %v1257
  %v1463 = vunpack.c.h.b16 %v1257
  %v1464 = vunpack.c.l.b16 %v1258
  %v1465 = vunpack.c.h.b16 %v1258
  %v1466 = vunpack.c.l.b16 %v1259
  %v1467 = vunpack.c.h.b16 %v1259
  %v1468 = vunpack.c.l.b16 %v1260
  %v1469 = vunpack.c.h.b16 %v1260
  %v1470 = vunpack.c.l.b16 %v1261
  %v1471 = vunpack.c.h.b16 %v1261
  %v1472 = vunpack.c.l.b16 %v1262
  %v1473 = vunpack.c.h.b16 %v1262
  %v1474 = vunpack.c.l.b16 %v1263
  %v1475 = vunpack.c.h.b16 %v1263
  %v1476 = vunpack.c.l.b16 %v1264
  %v1477 = vunpack.c.h.b16 %v1264
  %v1478 = vunpack.c.l.b16 %v1265
  %v1479 = vunpack.c.h.b16 %v1265
  %v1480 = vunpack.c.l.b16 %v1266
  %v1481 = vunpack.c.h.b16 %v1266
  %v1482 = vunpack.c.l.b16 %v1267
  %v1483 = vunpack.c.h.b16 %v1267
  %v1484 = vunpack.c.l.b16 %v1268
  %v1485 = vunpack.c.h.b16 %v1268
  %v1486 = vunpack.c.l.b16 %v1269
  %v1487 = vunpack.c.h.b16 %v1269
  %v1488 = vunpack.c.l.b16 %v1270
  %v1489 = vunpack.c.h.b16 %v1270
  %v1490 = vunpack.c.l.b16 %v1271
  %v1491 = vunpack.c.h.b16 %v1271
  %v1492 = vunpack.c.l.b16 %v1272
  %v1493 = vunpack.c.h.b16 %v1272
  %v1494 = vunpack.c.l.b16 %v1273
  %v1495 = vunpack.c.h.b16 %v1273
  %v1496 = vunpack.c.l.b16 %v1274
  %v1497 = vunpack.c.h.b16 %v1274
  %v1498 = vunpack.c.l.b16 %v1275
  %v1499 = vunpack.c.h.b16 %v1275
  %v1500 = vunpack.c.l.b16 %v1276
  %v1501 = vunpack.c.h.b16 %v1276
  %v1502 = vunpack.c.l.b16 %v1277
  %v1503 = vunpack.c.h.b16 %v1277
  %v1504 = vunpack.c.l.b16 %v1278
  %v1505 = vunpack.c.h.b16 %v1278
  %v1506 = vunpack.c.l.b16 %v1279
  %v1507 = vunpack.c.h.b16 %v1279
  %v1508 = vunpack.c.l.b16 %v1280
  %v1509 = vunpack.c.h.b16 %v1280
  %v1510 = vunpack.c.l.b16 %v1281
  %v1511 = vunpack.c.h.b16 %v1281
  %v1512 = vunpack.c.l.b16 %v1282
  %v1513 = vunpack.c.h.b16 %v1282
  %v1514 = vunpack.c.l.b16 %v1283
  %v1515 = vunpack.c.h.b16 %v1283
  %v1516 = vunpack.c.l.b16 %v1284
  %v1517 = vunpack.c.h.b16 %v1284
  %v1518 = vunpack.c.l.b16 %v1285
  %v1519 = vunpack.c.h.b16 %v1285
  %v1520 = vpack.c.b16 %v1400, %v1392
  %v1521 = vpack.c.b16 %v1401, %v1393
  %v1522 = vpack.c.b16 %v1402, %v1394
  %v1523 = vpack.c.b16 %v1403, %v1395
  %v1524 = vpack.c.b16 %v1404, %v1396
  %v1525 = vpack.c.b16 %v1405, %v1397
  %v1526 = vpack.c.b16 %v1406, %v1398
  %v1527 = vpack.c.b16 %v1407, %v1399
  %v1528 = vpack.c.b16 %v1416, %v1408
  %v1529 = vpack.c.b16 %v1417, %v1409
  %v1530 = vpack.c.b16 %v1418, %v1410
  %v1531 = vpack.c.b16 %v1419, %v1411
  %v1532 = vpack.c.b16 %v1420, %v1412
  %v1533 = vpack.c.b16 %v1421, %v1413
  %v1534 = vpack.c.b16 %v1422, %v1414
  %v1535 = vpack.c.b16 %v1423, %v1415
  %v1536 = vpack.c.b16 %v1432, %v1424
  %v1537 = vpack.c.b16 %v1433, %v1425
  %v1538 = vpack.c.b16 %v1434, %v1426
  %v1539 = vpack.c.b16 %v1435, %v1427
  %v1540 = vpack.c.b16 %v1436, %v1428
  %v1541 = vpack.c.b16 %v1437, %v1429
  %v1542 = vpack.c.b16 %v1438, %v1430
  %v1543 = vpack.c.b16 %v1439, %v1431
  %v1544 = vpack.c.b16 %v1448, %v1440
  %v1545 = vpack.c.b16 %v1449, %v1441
  %v1546 = vpack.c.b16 %v1450, %v1442
  %v1547 = vpack.c.b16 %v1451, %v1443
  %v1548 = vpack.c.b16 %v1452, %v1444
  %v1549 = vpack.c.b16 %v1453, %v1445
  %v1550 = vpack.c.b16 %v1454, %v1446
  %v1551 = vpack.c.b16 %v1455, %v1447
  %v1552 = vpack.c.b16 %v1464, %v1456
  %v1553 = vpack.c.b16 %v1465, %v1457
  %v1554 = vpack.c.b16 %v1466, %v1458
  %v1555 = vpack.c.b16 %v1467, %v1459
  %v1556 = vpack.c.b16 %v1468, %v1460
  %v1557 = vpack.c.b16 %v1469, %v1461
  %v1558 = vpack.c.b16 %v1470, %v1462
  %v1559 = vpack.c.b16 %v1471, %v1463
  %v1560 = vpack.c.b16 %v1480, %v1472
  %v1561 = vpack.c.b16 %v1481, %v1473
  %v1562 = vpack.c.b16 %v1482, %v1474
  %v1563 = vpack.c.b16 %v1483, %v1475
  %v1564 = vpack.c.b16 %v1484, %v1476
  %v1565 = vpack.c.b16 %v1485, %v1477
  %v1566 = vpack.c.b16 %v1486, %v1478
  %v1567 = vpack.c.b16 %v1487, %v1479
  %v1568 = vpack.c.b16 %v1496, %v1488
  %v1569 = vpack.c.b16 %v1497, %v1489
  %v1570 = vpack.c.b16 %v1498, %v1490
  %v1571 = vpack.c.b16 %v1499, %v1491
  %v1572 = vpack.c.b16 %v1500, %v1492
  %v1573 = vpack.c.b16 %v1501, %v1493
  %v1574 = vpack.c.b16 %v1502, %v1494
  %v1575 = vpack.c.b16 %v1503, %v1495
  %v1576 = vpack.c.b16 %v1512, %v1504
  %v1577 = vpack.c.b16 %v1513, %v1505
  %v1578 = vpack.c.b16 %v1514, %v1506
  %v1579 = vpack.c.b16 %v1515, %v1507
  %v1580 = vpack.c.b16 %v1516, %v1508
  %v1581 = vpack.c.b16 %v1517, %v1509
  %v1582 = vpack.c.b16 %v1518, %v1510
  %v1583 = vpack.c.b16 %v1519, %v1511
  %1648 = vmatprep.subr.bf16.mxu0 %v1521
  %1649 = vmatpush1.bf16.msra.mxu0 %v1520
  %1650 = vmatprep.subr.bf16.mxu0 %v1529
  %1651 = vmatpush1.bf16.msra.mxu0 %v1528
  %1652 = vmatprep.subr.bf16.mxu0 %v1537
  %1653 = vmatpush1.bf16.msra.mxu0 %v1536
  %1654 = vmatprep.subr.bf16.mxu0 %v1545
  %1655 = vmatpush1.bf16.msra.mxu0 %v1544
  %1656 = vmatprep.subr.bf16.mxu0 %v1553
  %1657 = vmatpush1.bf16.msra.mxu0 %v1552
  %1658 = vmatprep.subr.bf16.mxu0 %v1561
  %1659 = vmatpush1.bf16.msra.mxu0 %v1560
  %1660 = vmatprep.subr.bf16.mxu0 %v1569
  %1661 = vmatpush1.bf16.msra.mxu0 %v1568
  %1662 = vmatprep.subr.bf16.mxu0 %v1577
  %1663 = vmatpush1.bf16.msra.mxu0 %v1576
  %1664 = vmatprep.subr.bf16.mxu0 0
  %1665 = vmatpush1.bf16.msra.mxu0 0
  %1666 = vmatprep.subr.bf16.mxu0 0
  %1667 = vmatpush1.bf16.msra.mxu0 0
  %1668 = vmatprep.subr.bf16.mxu0 0
  %1669 = vmatpush1.bf16.msra.mxu0 0
  %1670 = vmatprep.subr.bf16.mxu0 0
  %1671 = vmatpush1.bf16.msra.mxu0 0
  %1672 = vmatprep.subr.bf16.mxu0 0
  %1673 = vmatpush1.bf16.msra.mxu0 0
  %1674 = vmatprep.subr.bf16.mxu0 0
  %1675 = vmatpush1.bf16.msra.mxu0 0
  %1676 = vmatprep.subr.bf16.mxu0 0
  %1677 = vmatpush1.bf16.msra.mxu0 0
  %1678 = vmatprep.subr.bf16.mxu0 0
  %1679 = vmatpush1.bf16.msra.mxu0 0
  %1680 = vmatprep.mubr.bf16.mxu0 0
  %1681 = vmatmul.mubr.bf16.gmra.mrb[0].mxu0 %v1221
  %v1682 = vpop.f32.mrb[0].mxu0
  %v1683 = vadd.f32 %v1291, %v1682
  %v1684 = vpop.f32.mrb[0].mxu0
  %v1685 = vadd.f32 %v1295, %v1684
  %v1686 = vpop.f32.mrb[0].mxu0
  %v1687 = vpop.f32.mrb[0].mxu0
  %1688 = vdwg.mxu0
  %1689 = vmatprep.subr.bf16.mxu0 %v1523
  %1690 = vmatpush1.bf16.msra.mxu0 %v1522
  %1691 = vmatprep.subr.bf16.mxu0 %v1531
  %1692 = vmatpush1.bf16.msra.mxu0 %v1530
  %1693 = vmatprep.subr.bf16.mxu0 %v1539
  %1694 = vmatpush1.bf16.msra.mxu0 %v1538
  %1695 = vmatprep.subr.bf16.mxu0 %v1547
  %1696 = vmatpush1.bf16.msra.mxu0 %v1546
  %1697 = vmatprep.subr.bf16.mxu0 %v1555
  %1698 = vmatpush1.bf16.msra.mxu0 %v1554
  %1699 = vmatprep.subr.bf16.mxu0 %v1563
  %1700 = vmatpush1.bf16.msra.mxu0 %v1562
  %1701 = vmatprep.subr.bf16.mxu0 %v1571
  %1702 = vmatpush1.bf16.msra.mxu0 %v1570
  %1703 = vmatprep.subr.bf16.mxu0 %v1579
  %1704 = vmatpush1.bf16.msra.mxu0 %v1578
  %1705 = vmatprep.subr.bf16.mxu0 0
  %1706 = vmatpush1.bf16.msra.mxu0 0
  %1707 = vmatprep.subr.bf16.mxu0 0
  %1708 = vmatpush1.bf16.msra.mxu0 0
  %1709 = vmatprep.subr.bf16.mxu0 0
  %1710 = vmatpush1.bf16.msra.mxu0 0
  %1711 = vmatprep.subr.bf16.mxu0 0
  %1712 = vmatpush1.bf16.msra.mxu0 0
  %1713 = vmatprep.subr.bf16.mxu0 0
  %1714 = vmatpush1.bf16.msra.mxu0 0
  %1715 = vmatprep.subr.bf16.mxu0 0
  %1716 = vmatpush1.bf16.msra.mxu0 0
  %1717 = vmatprep.subr.bf16.mxu0 0
  %1718 = vmatpush1.bf16.msra.mxu0 0
  %1719 = vmatprep.subr.bf16.mxu0 0
  %1720 = vmatpush1.bf16.msra.mxu0 0
  %1721 = vmatprep.mubr.bf16.mxu0 0
  %1722 = vmatmul.mubr.bf16.gmra.mrb[0].mxu0 %v1221
  %v1723 = vpop.f32.mrb[0].mxu0
  %v1724 = vadd.f32 %v1299, %v1723
  %v1725 = vpop.f32.mrb[0].mxu0
  %v1726 = vadd.f32 %v1303, %v1725
  %v1727 = vpop.f32.mrb[0].mxu0
  %v1728 = vpop.f32.mrb[0].mxu0
  %1729 = vdwg.mxu0
  %1730 = vmatprep.subr.bf16.mxu0 %v1525
  %1731 = vmatpush1.bf16.msra.mxu0 %v1524
  %1732 = vmatprep.subr.bf16.mxu0 %v1533
  %1733 = vmatpush1.bf16.msra.mxu0 %v1532
  %1734 = vmatprep.subr.bf16.mxu0 %v1541
  %1735 = vmatpush1.bf16.msra.mxu0 %v1540
  %1736 = vmatprep.subr.bf16.mxu0 %v1549
  %1737 = vmatpush1.bf16.msra.mxu0 %v1548
  %1738 = vmatprep.subr.bf16.mxu0 %v1557
  %1739 = vmatpush1.bf16.msra.mxu0 %v1556
  %1740 = vmatprep.subr.bf16.mxu0 %v1565
  %1741 = vmatpush1.bf16.msra.mxu0 %v1564
  %1742 = vmatprep.subr.bf16.mxu0 %v1573
  %1743 = vmatpush1.bf16.msra.mxu0 %v1572
  %1744 = vmatprep.subr.bf16.mxu0 %v1581
  %1745 = vmatpush1.bf16.msra.mxu0 %v1580
  %1746 = vmatprep.subr.bf16.mxu0 0
  %1747 = vmatpush1.bf16.msra.mxu0 0
  %1748 = vmatprep.subr.bf16.mxu0 0
  %1749 = vmatpush1.bf16.msra.mxu0 0
  %1750 = vmatprep.subr.bf16.mxu0 0
  %1751 = vmatpush1.bf16.msra.mxu0 0
  %1752 = vmatprep.subr.bf16.mxu0 0
  %1753 = vmatpush1.bf16.msra.mxu0 0
  %1754 = vmatprep.subr.bf16.mxu0 0
  %1755 = vmatpush1.bf16.msra.mxu0 0
  %1756 = vmatprep.subr.bf16.mxu0 0
  %1757 = vmatpush1.bf16.msra.mxu0 0
  %1758 = vmatprep.subr.bf16.mxu0 0
  %1759 = vmatpush1.bf16.msra.mxu0 0
  %1760 = vmatprep.subr.bf16.mxu0 0
  %1761 = vmatpush1.bf16.msra.mxu0 0
  %1762 = vmatprep.mubr.bf16.mxu0 0
  %1763 = vmatmul.mubr.bf16.gmra.mrb[0].mxu0 %v1221
  %v1764 = vpop.f32.mrb[0].mxu0
  %v1765 = vadd.f32 %v1307, %v1764
  %v1766 = vpop.f32.mrb[0].mxu0
  %v1767 = vadd.f32 %v1311, %v1766
  %v1768 = vpop.f32.mrb[0].mxu0
  %v1769 = vpop.f32.mrb[0].mxu0
  %1770 = vdwg.mxu0
  %1771 = vmatprep.subr.bf16.mxu0 %v1527
  %1772 = vmatpush1.bf16.msra.mxu0 %v1526
  %1773 = vmatprep.subr.bf16.mxu0 %v1535
  %1774 = vmatpush1.bf16.msra.mxu0 %v1534
  %1775 = vmatprep.subr.bf16.mxu0 %v1543
  %1776 = vmatpush1.bf16.msra.mxu0 %v1542
  %1777 = vmatprep.subr.bf16.mxu0 %v1551
  %1778 = vmatpush1.bf16.msra.mxu0 %v1550
  %1779 = vmatprep.subr.bf16.mxu0 %v1559
  %1780 = vmatpush1.bf16.msra.mxu0 %v1558
  %1781 = vmatprep.subr.bf16.mxu0 %v1567
  %1782 = vmatpush1.bf16.msra.mxu0 %v1566
  %1783 = vmatprep.subr.bf16.mxu0 %v1575
  %1784 = vmatpush1.bf16.msra.mxu0 %v1574
  %1785 = vmatprep.subr.bf16.mxu0 %v1583
  %1786 = vmatpush1.bf16.msra.mxu0 %v1582
  %1787 = vmatprep.subr.bf16.mxu0 0
  %1788 = vmatpush1.bf16.msra.mxu0 0
  %1789 = vmatprep.subr.bf16.mxu0 0
  %1790 = vmatpush1.bf16.msra.mxu0 0
  %1791 = vmatprep.subr.bf16.mxu0 0
  %1792 = vmatpush1.bf16.msra.mxu0 0
  %1793 = vmatprep.subr.bf16.mxu0 0
  %1794 = vmatpush1.bf16.msra.mxu0 0
  %1795 = vmatprep.subr.bf16.mxu0 0
  %1796 = vmatpush1.bf16.msra.mxu0 0
  %1797 = vmatprep.subr.bf16.mxu0 0
  %1798 = vmatpush1.bf16.msra.mxu0 0
  %1799 = vmatprep.subr.bf16.mxu0 0
  %1800 = vmatpush1.bf16.msra.mxu0 0
  %1801 = vmatprep.subr.bf16.mxu0 0
  %1802 = vmatpush1.bf16.msra.mxu0 0
  %1803 = vmatprep.mubr.bf16.mxu0 0
  %1804 = vmatmul.mubr.bf16.gmra.mrb[0].mxu0 %v1221
  %v1805 = vpop.f32.mrb[0].mxu0
  %v1806 = vadd.f32 %v1315, %v1805
  %v1807 = vpop.f32.mrb[0].mxu0
  %v1808 = vadd.f32 %v1319, %v1807
  %v1809 = vpop.f32.mrb[0].mxu0
  %v1810 = vpop.f32.mrb[0].mxu0
  %1811 = vdwg.mxu0
  %v1812 = vsub.f32 0.0, %v1683
  %v1813 = vsub.f32 0.0, %v1685
  %v1814 = vsub.f32 0.0, %v1724
  %v1815 = vsub.f32 0.0, %v1726
  %v1816 = vsub.f32 0.0, %v1765
  %v1817 = vsub.f32 0.0, %v1767
  %v1818 = vsub.f32 0.0, %v1806
  %v1819 = vsub.f32 0.0, %v1808
  %v1820 = vmul.f32 %v1812, 1.442695
  %v1821 = vpow.pop %v1820
  %v1822 = vmul.f32 %v1813, 1.442695
  %v1823 = vpow.pop %v1822
  %v1824 = vmul.f32 %v1814, 1.442695
  %v1825 = vpow.pop %v1824
  %v1826 = vmul.f32 %v1815, 1.442695
  %v1827 = vpow.pop %v1826
  %v1828 = vmul.f32 %v1816, 1.442695
  %v1829 = vpow.pop %v1828
  %v1830 = vmul.f32 %v1817, 1.442695
  %v1831 = vpow.pop %v1830
  %v1832 = vmul.f32 %v1818, 1.442695
  %v1833 = vpow.pop %v1832
  %v1834 = vmul.f32 %v1819, 1.442695
  %v1835 = vpow.pop %v1834
  %v1836 = vadd.f32 %v1821, 1.0
  %v1837 = vadd.f32 %v1823, 1.0
  %v1838 = vadd.f32 %v1825, 1.0
  %v1839 = vadd.f32 %v1827, 1.0
  %v1840 = vadd.f32 %v1829, 1.0
  %v1841 = vadd.f32 %v1831, 1.0
  %v1842 = vadd.f32 %v1833, 1.0
  %v1843 = vadd.f32 %v1835, 1.0
  %v1844 = vrcp.pop %v1836
  %v1845 = vrcp.pop %v1837
  %v1846 = vrcp.pop %v1838
  %v1847 = vrcp.pop %v1839
  %v1848 = vrcp.pop %v1840
  %v1849 = vrcp.pop %v1841
  %v1850 = vrcp.pop %v1842
  %v1851 = vrcp.pop %v1843
  %1852 = vst [vmem:[%s17] sm:$0xff] %v1844
  %1853 = vst [vmem:[%s17 + $0x8] sm:$0xff] %v1845
  %1854 = vst [vmem:[%s17 + $0x10] sm:$0xff] %v1846
  %1855 = vst [vmem:[%s17 + $0x18] sm:$0xff] %v1847
  %1856 = vst [vmem:[%s17 + $0x20] sm:$0xff] %v1848
  %1857 = vst [vmem:[%s17 + $0x28] sm:$0xff] %v1849
  %1858 = vst [vmem:[%s17 + $0x30] sm:$0xff] %v1850
  %1859 = vst [vmem:[%s17 + $0x38] sm:$0xff] %v1851
  // Predicated region
  $region70: #{ae_forward.1} parent=0 // pred_check
    _
  $region71: #{ae_forward.1} parent=0 // pred_check_branch
    %1861 = sbr.rel (0) target = $region73
  $region72: #{ae_forward.1} parent=0 // pred_region
    _
  $region73: #{ae_forward.1} parent=0 // pred_fallthru
    _
  // Predicated region
  $region74: #{ae_forward.1} parent=0 // pred_check
    _
  $region75: #{ae_forward.1} parent=0 // pred_check_branch
    %1863 = sbr.rel (0) target = $region77
  $region76: #{ae_forward.1} parent=0 // pred_region
    _
  $region77: #{ae_forward.1} parent=0 // pred_fallthru
    _

</llo_original>
